<compile_context>
chip_gen: v7x
topology: tpu7x:2x2x1
jax: 0.10.0
libtpu: 0.0.40
codegen_flags: <defaults>
</compile_context>

<pallas_src>
import functools

import jax
import jax.numpy as jnp
from jax.experimental import pallas as pl
from jax.experimental.pallas import tpu as pltpu

K_IN = 28 * 28        # 784 -- full last dim of the flattened input (no K padding needed)
HID = 512
N_OUT = 10
N_PAD = 128           # lane-dense final layer / output width


def mlp_kernel(x_ref, w1_ref, b1_ref, w2_ref, b2_ref, w3_ref, b3_ref, o_ref):
    # x: (TM, 784) f32; w1: (784, 512) bf16; w2: (512, 512) bf16; w3: (512, 128) bf16
    # Matmuls run on the MXU with f32 accumulation; bias add + ReLU stay in f32
    # (v5e VPU has no bf16 path); activations are cast to bf16 only as MXU inputs.
    x = x_ref[...].astype(jnp.bfloat16)                                     # in-kernel cast
    h1 = jnp.dot(x, w1_ref[...], preferred_element_type=jnp.float32)
    h1 = jnp.maximum(h1 + b1_ref[...], 0.0)                                 # Linear + ReLU
    h2 = jnp.dot(h1.astype(jnp.bfloat16), w2_ref[...],
                 preferred_element_type=jnp.float32)
    h2 = jnp.maximum(h2 + b2_ref[...], 0.0)                                 # Linear + ReLU
    logits = jnp.dot(h2.astype(jnp.bfloat16), w3_ref[...],
                     preferred_element_type=jnp.float32)
    o_ref[...] = (logits + b3_ref[...]).astype(o_ref.dtype)                 # final Linear


def prepare_params(params):
    """One-time: cast weights to bf16 (halves HBM traffic) and lane-pad the last layer."""
    w1, b1, w2, b2, w3, b3 = params
    w1p = w1.astype(jnp.bfloat16)                                           # (784, 512)
    w2p = w2.astype(jnp.bfloat16)                                           # (512, 512)
    w3p = jnp.pad(w3, ((0, 0), (0, N_PAD - N_OUT))).astype(jnp.bfloat16)    # (512, 128)
    b3p = jnp.pad(b3, ((0, 0), (0, N_PAD - N_OUT)))                         # (1, 128) f32
    return (w1p, b1, w2p, b2, w3p, b3p)


def _default_block_m():
    """1024-row tiles on v6e/v7x (fast HBM, ample VMEM); 512 on v5e and unknown chips."""
    try:
        kind = jax.devices()[0].device_kind.lower()
    except Exception:
        return 512
    return 1024 if ("v6" in kind or "v7" in kind) else 512


def _pick_tile(batch, block_m):
    if batch < block_m:
        # bf16 packs two rows per sublane (native (16,128) tile) -> round up to 16.
        tm = ((batch + 15) // 16) * 16
    else:
        tm = block_m
    # Megacore: "parallel" only shards across v7x's 2 TensorCores when the grid has
    # at least 2 tiles; split moderate batches instead of leaving one core idle.
    if batch > 256 and (batch + tm - 1) // tm < 2:
        half = (batch + 1) // 2
        tm = ((half + 255) // 256) * 256
    return tm


@functools.partial(jax.jit, static_argnames=("block_m",))
def neural_network_forward(x, prepared, *, block_m=None):
    """x: (B, 28, 28) float32 -> logits (B, 10) float32."""
    w1, b1, w2, b2, w3, b3 = prepared
    B = x.shape[0]
    x_flat = x.reshape(B, K_IN)                                    # nn.Flatten()

    if block_m is None:
        block_m = _default_block_m()
    tm = _pick_tile(B, block_m)
    b_pad = ((B + tm - 1) // tm) * tm
    if b_pad != B:
        x_flat = jnp.pad(x_flat, ((0, b_pad - B), (0, 0)))         # batch pad only, stays f32

    # TODO(synk): optionally single-buffer the constant weight specs (pl.Buffered(1)) and
    # use fp8 weights on v7x once accuracy is validated; kept bf16/double-buffered here.
    const = lambda shape: pl.BlockSpec(shape, lambda i: (0, 0))    # weights: constant block
    out = pl.pallas_call(
        mlp_kernel,
        out_shape=jax.ShapeDtypeStruct((b_pad, N_PAD), jnp.float32),
        grid=(b_pad // tm,),
        in_specs=[
            pl.BlockSpec((tm, K_IN), lambda i: (i, 0)),            # raw f32 activations stream
            const((K_IN, HID)), const((1, HID)),
            const((HID, HID)),  const((1, HID)),
            const((HID, N_PAD)), const((1, N_PAD)),
        ],
        out_specs=pl.BlockSpec((tm, N_PAD), lambda i: (i, 0)),     # lane-dense output slab
        compiler_params=pltpu.CompilerParams(
            dimension_semantics=("parallel",),                     # shard batch tiles on v7x
            vmem_limit_bytes=48 * 1024 * 1024,                     # headroom for big tiles;
        ),                                                         # under v7x's 64 MiB VMEM
    )(x_flat, w1, b1, w2, b2, w3, b3)
    return out[:B, :N_OUT]


def init_params(key):
    """Deterministic init matching nn.Linear default: U(-1/sqrt(fan_in), 1/sqrt(fan_in))."""
    def linear(key, fan_in, fan_out):
        kw, kb = jax.random.split(key)
        bound = 1.0 / jnp.sqrt(fan_in)
        w = jax.random.uniform(kw, (fan_in, fan_out), jnp.float32, -bound, bound)
        b = jax.random.uniform(kb, (1, fan_out), jnp.float32, -bound, bound)
        return w, b

    k1, k2, k3 = jax.random.split(key, 3)
    w1, b1 = linear(k1, K_IN, HID)
    w2, b2 = linear(k2, HID, HID)
    w3, b3 = linear(k3, HID, N_OUT)
    return (w1, b1, w2, b2, w3, b3)


if __name__ == "__main__":
    key = jax.random.PRNGKey(0)
    kx, kp = jax.random.split(key)

    B = 8  # small batch
    x = jax.random.normal(kx, (B, 28, 28), jnp.float32)
    params = init_params(kp)
    prepared = prepare_params(params)

    logits = neural_network_forward(x, prepared)
    jax.block_until_ready(logits)
    assert logits.shape == (B, N_OUT)

    # Reference mirroring the kernel's bf16-weight / f32-accumulate math.
    w1p, b1, w2p, b2, w3p, b3p = prepared
    xb = x.reshape(B, K_IN).astype(jnp.bfloat16)
    h1 = jnp.maximum(jnp.dot(xb, w1p, preferred_element_type=jnp.float32) + b1, 0.0)
    h2 = jnp.maximum(jnp.dot(h1.astype(jnp.bfloat16), w2p,
                             preferred_element_type=jnp.float32) + b2, 0.0)
    ref = (jnp.dot(h2.astype(jnp.bfloat16), w3p,
                   preferred_element_type=jnp.float32) + b3p)[:, :N_OUT]
    assert jnp.allclose(logits, ref, atol=1e-2, rtol=1e-2)

    # Also exercise a multi-tile batch path once (grid >= 2, padded remainder sliced off).
    B2 = 520
    x2 = jax.random.normal(kx, (B2, 28, 28), jnp.float32)
    logits2 = neural_network_forward(x2, prepared)
    jax.block_until_ready(logits2)
    assert logits2.shape == (B2, N_OUT)

    print("KERNEL_OK")
</pallas_src>

<mosaic_0001>
module attributes {stable_mosaic.version = 11 : i64} {
  func.func @mlp_kernel(%arg0: i32, %arg1: memref<16x784xf32, #tpu.memory_space<vmem>>, %arg2: memref<784x512xbf16, #tpu.memory_space<vmem>>, %arg3: memref<1x512xf32, #tpu.memory_space<vmem>>, %arg4: memref<512x512xbf16, #tpu.memory_space<vmem>>, %arg5: memref<1x512xf32, #tpu.memory_space<vmem>>, %arg6: memref<512x128xbf16, #tpu.memory_space<vmem>>, %arg7: memref<1x128xf32, #tpu.memory_space<vmem>>, %arg8: memref<16x128xf32, #tpu.memory_space<vmem>>) attributes {dimension_semantics = [#tpu.dimension_semantics<parallel>], iteration_bounds = array<i64: 1>, scalar_prefetch = 0 : i64, scratch_operands = 0 : i64, tpu.core_type = #tpu.core_type<tc>, window_params = [{transform_indices = @transform_0, window_bounds = array<i64: 16, 784>}, {pipeline_mode = #tpu.pipeline_mode<synchronous>, transform_indices = @transform_1, window_bounds = array<i64: 784, 512>}, {pipeline_mode = #tpu.pipeline_mode<synchronous>, transform_indices = @transform_2, window_bounds = array<i64: 1, 512>}, {pipeline_mode = #tpu.pipeline_mode<synchronous>, transform_indices = @transform_3, window_bounds = array<i64: 512, 512>}, {pipeline_mode = #tpu.pipeline_mode<synchronous>, transform_indices = @transform_4, window_bounds = array<i64: 1, 512>}, {pipeline_mode = #tpu.pipeline_mode<synchronous>, transform_indices = @transform_5, window_bounds = array<i64: 512, 128>}, {pipeline_mode = #tpu.pipeline_mode<synchronous>, transform_indices = @transform_6, window_bounds = array<i64: 1, 128>}, {transform_indices = @transform_7, window_bounds = array<i64: 16, 128>}]} {
    %c0 = arith.constant 0 : index
    %c0_0 = arith.constant 0 : index
    %0 = vector.load %arg1[%c0, %c0_0] : memref<16x784xf32, #tpu.memory_space<vmem>>, vector<16x784xf32>
    %1 = arith.truncf %0 : vector<16x784xf32> to vector<16x784xbf16>
    %c0_1 = arith.constant 0 : index
    %c0_2 = arith.constant 0 : index
    %2 = vector.load %arg2[%c0_1, %c0_2] : memref<784x512xbf16, #tpu.memory_space<vmem>>, vector<784x512xbf16>
    %cst = arith.constant dense<0.000000e+00> : vector<16x512xf32>
    %3 = tpu.matmul %1, %2, %cst {dimension_numbers = #tpu.dot_dimension_numbers<[1], [0], [0], [1], [0, 0, 1, 1], [], []>} : vector<16x784xbf16>, vector<784x512xbf16>, vector<16x512xf32> -> vector<16x512xf32>
    %c0_3 = arith.constant 0 : index
    %c0_4 = arith.constant 0 : index
    %4 = vector.load %arg3[%c0_3, %c0_4] : memref<1x512xf32, #tpu.memory_space<vmem>>, vector<1x512xf32>
    %5 = vector.broadcast %4 : vector<1x512xf32> to vector<16x512xf32>
    %6 = arith.addf %3, %5 : vector<16x512xf32>
    %cst_5 = arith.constant 0.000000e+00 : f32
    %7 = vector.broadcast %cst_5 : f32 to vector<16x512xf32>
    %8 = arith.maximumf %6, %7 : vector<16x512xf32>
    %9 = arith.truncf %8 : vector<16x512xf32> to vector<16x512xbf16>
    %c0_6 = arith.constant 0 : index
    %c0_7 = arith.constant 0 : index
    %10 = vector.load %arg4[%c0_6, %c0_7] : memref<512x512xbf16, #tpu.memory_space<vmem>>, vector<512x512xbf16>
    %cst_8 = arith.constant dense<0.000000e+00> : vector<16x512xf32>
    %11 = tpu.matmul %9, %10, %cst_8 {dimension_numbers = #tpu.dot_dimension_numbers<[1], [0], [0], [1], [0, 0, 1, 1], [], []>} : vector<16x512xbf16>, vector<512x512xbf16>, vector<16x512xf32> -> vector<16x512xf32>
    %c0_9 = arith.constant 0 : index
    %c0_10 = arith.constant 0 : index
    %12 = vector.load %arg5[%c0_9, %c0_10] : memref<1x512xf32, #tpu.memory_space<vmem>>, vector<1x512xf32>
    %13 = vector.broadcast %12 : vector<1x512xf32> to vector<16x512xf32>
    %14 = arith.addf %11, %13 : vector<16x512xf32>
    %cst_11 = arith.constant 0.000000e+00 : f32
    %15 = vector.broadcast %cst_11 : f32 to vector<16x512xf32>
    %16 = arith.maximumf %14, %15 : vector<16x512xf32>
    %17 = arith.truncf %16 : vector<16x512xf32> to vector<16x512xbf16>
    %c0_12 = arith.constant 0 : index
    %c0_13 = arith.constant 0 : index
    %18 = vector.load %arg6[%c0_12, %c0_13] : memref<512x128xbf16, #tpu.memory_space<vmem>>, vector<512x128xbf16>
    %cst_14 = arith.constant dense<0.000000e+00> : vector<16x128xf32>
    %19 = tpu.matmul %17, %18, %cst_14 {dimension_numbers = #tpu.dot_dimension_numbers<[1], [0], [0], [1], [0, 0, 1, 1], [], []>} : vector<16x512xbf16>, vector<512x128xbf16>, vector<16x128xf32> -> vector<16x128xf32>
    %c0_15 = arith.constant 0 : index
    %c0_16 = arith.constant 0 : index
    %20 = vector.load %arg7[%c0_15, %c0_16] : memref<1x128xf32, #tpu.memory_space<vmem>>, vector<1x128xf32>
    %21 = vector.broadcast %20 : vector<1x128xf32> to vector<16x128xf32>
    %22 = arith.addf %19, %21 : vector<16x128xf32>
    %c0_17 = arith.constant 0 : index
    %c0_18 = arith.constant 0 : index
    %23 = vector.load %arg8[%c0_17, %c0_18] : memref<16x128xf32, #tpu.memory_space<vmem>>, vector<16x128xf32>
    tpu.vector_store %arg8[%c0_17, %c0_18], %22 {strides = array<i32>} : memref<16x128xf32, #tpu.memory_space<vmem>>, vector<16x128xf32>,
    return
  }
  func.func @transform_0(%arg0: i32) -> (i32, i32) {
    %c0_i32 = arith.constant 0 : i32
    %c0_i32_0 = arith.constant 0 : i32
    return %arg0, %c0_i32 : i32, i32
  }
  func.func @transform_1(%arg0: i32) -> (i32, i32) {
    %c0_i32 = arith.constant 0 : i32
    %c0_i32_0 = arith.constant 0 : i32
    %c0_i32_1 = arith.constant 0 : i32
    return %c0_i32, %c0_i32_0 : i32, i32
  }
  func.func @transform_2(%arg0: i32) -> (i32, i32) {
    %c0_i32 = arith.constant 0 : i32
    %c0_i32_0 = arith.constant 0 : i32
    %c0_i32_1 = arith.constant 0 : i32
    return %c0_i32, %c0_i32_0 : i32, i32
  }
  func.func @transform_3(%arg0: i32) -> (i32, i32) {
    %c0_i32 = arith.constant 0 : i32
    %c0_i32_0 = arith.constant 0 : i32
    %c0_i32_1 = arith.constant 0 : i32
    return %c0_i32, %c0_i32_0 : i32, i32
  }
  func.func @transform_4(%arg0: i32) -> (i32, i32) {
    %c0_i32 = arith.constant 0 : i32
    %c0_i32_0 = arith.constant 0 : i32
    %c0_i32_1 = arith.constant 0 : i32
    return %c0_i32, %c0_i32_0 : i32, i32
  }
  func.func @transform_5(%arg0: i32) -> (i32, i32) {
    %c0_i32 = arith.constant 0 : i32
    %c0_i32_0 = arith.constant 0 : i32
    %c0_i32_1 = arith.constant 0 : i32
    return %c0_i32, %c0_i32_0 : i32, i32
  }
  func.func @transform_6(%arg0: i32) -> (i32, i32) {
    %c0_i32 = arith.constant 0 : i32
    %c0_i32_0 = arith.constant 0 : i32
    %c0_i32_1 = arith.constant 0 : i32
    return %c0_i32, %c0_i32_0 : i32, i32
  }
  func.func @transform_7(%arg0: i32) -> (i32, i32) {
    %c0_i32 = arith.constant 0 : i32
    %c0_i32_0 = arith.constant 0 : i32
    return %arg0, %c0_i32 : i32, i32
  }
}

</mosaic_0001>

<llo_original>
// kernel: neural_network_forward.1
$region0: #{neural_network_forward.1}
  #allocation0 [shape = 'u32[]', space=smem, size = 0x4, offset = 0x4, fixed_abs, tag = 'smem constant byte address 0x4 - core index']
  #allocation1 [shape = 'u32[144,128]{1,0:T(1,128)}', space=vmem, size = 0x12000, scoped, tag = 'internal scratch']
  %s0 = inlined_call_operand.vmem [shape: f32[16,784], index: 0, kind: input, shape index: {}]
  %s1 = inlined_call_operand.hbm [shape: bf16[784,512], index: 1, kind: input, shape index: {}]
  %s2 = inlined_call_operand.vmem [shape: f32[1,512], index: 2, kind: input, shape index: {}]
  %s3 = inlined_call_operand.hbm [shape: bf16[512,512], index: 3, kind: input, shape index: {}]
  %s4 = inlined_call_operand.vmem [shape: f32[1,512], index: 4, kind: input, shape index: {}]
  %s5 = inlined_call_operand.vmem [shape: bf16[512,128], index: 5, kind: input, shape index: {}]
  %s6 = inlined_call_operand.vmem [shape: f32[1,128], index: 6, kind: input, shape index: {}]
  %s7 = inlined_call_operand.vmem [shape: f32[16,128], index: 7, kind: output, shape index: {}]
  %s8 = sld [smem:[#allocation0]]
  $region46: #{neural_network_forward.1} parent=0
    _
  %s10 = ssub.s32 1, %s8
  %s11 = scalar_select 0, %s10, %s8
  $region1: #{neural_network_forward.1} parent=0
    #allocation2 [shape = 'u8[802816]{0}', space=vmem, size = 0xc4000, scoped, tag = 'input window, operand 1, single buffered']
    #allocation3 [shape = 's32[1]{0}', space=sflag, size = 0x4, scoped, tag = 'scoped memory for neural_network_forward.1']
    #allocation4 [shape = 'u8[524288]{0}', space=vmem, size = 0x80000, scoped, tag = 'input window, operand 3, single buffered']
    #allocation5 [shape = 's32[1]{0}', space=sflag, size = 0x4, scoped, tag = 'scoped memory for neural_network_forward.1']
    %12 = vsyncpa [#allocation3], 0
    %13 = vsyncpa [#allocation5], 0
    // Predicated region
    $region2: #{neural_network_forward.1} parent=1 // pred_check
      _
    $region3: #{neural_network_forward.1} parent=1 // pred_check_branch
      %15 = sbr.rel (0) target = $region5
    $region4: #{neural_network_forward.1} parent=1 // pred_region
      _
    $region5: #{neural_network_forward.1} parent=1 // pred_fallthru
      _
    // Predicated region
    $region6: #{neural_network_forward.1} parent=1 // pred_check
      _
    $region7: #{neural_network_forward.1} parent=1 // pred_check_branch
      %17 = sbr.rel (0) target = $region9
    $region8: #{neural_network_forward.1} parent=1 // pred_region
      %s19 = ssub.s32 25088, 25088
      %20 = vsyncadd [#allocation3], %s19
      %s21 = sshll.u32 [#allocation2], 4
      %s22 = int_to_ptr.vmem [resolvable:$true] %s21
      %27 = dma.hbm_to_vmem [thread:$0]  %s1, 25088, %s22, [#allocation3], 256, 256, 16
    $region9: #{neural_network_forward.1} parent=1 // pred_fallthru
      _
    // Predicated region
    $region10: #{neural_network_forward.1} parent=1 // pred_check
      _
    $region11: #{neural_network_forward.1} parent=1 // pred_check_branch
      %29 = sbr.rel (0) target = $region13
    $region12: #{neural_network_forward.1} parent=1 // pred_region
      _
    $region13: #{neural_network_forward.1} parent=1 // pred_fallthru
      _
    // Predicated region
    $region14: #{neural_network_forward.1} parent=1 // pred_check
      _
    $region15: #{neural_network_forward.1} parent=1 // pred_check_branch
      %31 = sbr.rel (0) target = $region17
    $region16: #{neural_network_forward.1} parent=1 // pred_region
      %s33 = ssub.s32 16384, 16384
      %34 = vsyncadd [#allocation5], %s33
      %s35 = sshll.u32 [#allocation4], 4
      %s36 = int_to_ptr.vmem [resolvable:$true] %s35
      %41 = dma.hbm_to_vmem [thread:$0]  %s3, 16384, %s36, [#allocation5], 256, 256, 16
    $region17: #{neural_network_forward.1} parent=1 // pred_fallthru
      _
    // Predicated region
    $region18: #{neural_network_forward.1} parent=1 // pred_check
      _
    $region19: #{neural_network_forward.1} parent=1 // pred_check_branch
      %43 = sbr.rel (0) target = $region21
    $region20: #{neural_network_forward.1} parent=1 // pred_region
      _
    $region21: #{neural_network_forward.1} parent=1 // pred_fallthru
      _
    // Predicated region
    $region22: #{neural_network_forward.1} parent=1 // pred_check
      _
    $region23: #{neural_network_forward.1} parent=1 // pred_check_branch
      %45 = sbr.rel (0) target = $region25
    $region24: #{neural_network_forward.1} parent=1 // pred_region
      _
    $region25: #{neural_network_forward.1} parent=1 // pred_fallthru
      _
    // Predicated region
    $region26: #{neural_network_forward.1} parent=1 // pred_check
      _
    $region27: #{neural_network_forward.1} parent=1 // pred_check_branch
      %47 = sbr.rel (0) target = $region29
    $region28: #{neural_network_forward.1} parent=1 // pred_region
      _
    $region29: #{neural_network_forward.1} parent=1 // pred_fallthru
      _
    // Predicated region
    $region30: #{neural_network_forward.1} parent=1 // pred_check
      _
    $region31: #{neural_network_forward.1} parent=1 // pred_check_branch
      %49 = sbr.rel (0) target = $region33
    $region32: #{neural_network_forward.1} parent=1 // pred_region
      %50 = dma.done [#allocation3], 25088
    $region33: #{neural_network_forward.1} parent=1 // pred_fallthru
      _
    // Predicated region
    $region34: #{neural_network_forward.1} parent=1 // pred_check
      _
    $region35: #{neural_network_forward.1} parent=1 // pred_check_branch
      %52 = sbr.rel (0) target = $region37
    $region36: #{neural_network_forward.1} parent=1 // pred_region
      %53 = dma.done [#allocation5], 16384
    $region37: #{neural_network_forward.1} parent=1 // pred_fallthru
      _
    %v55 = vld [vmem:[%s0] sm:$0xff]
    %v56 = vld [vmem:[%s0 + $0x8] sm:$0xff]
    %v57 = vld [vmem:[%s0 + $0x10] sm:$0xff]
    %v58 = vld [vmem:[%s0 + $0x18] sm:$0xff]
    %v59 = vld [vmem:[%s0 + $0x20] sm:$0xff]
    %v60 = vld [vmem:[%s0 + $0x28] sm:$0xff]
    %v61 = vld [vmem:[%s0 + $0x30] sm:$0xff]
    %v62 = vld [vmem:[%s0 + $0x38] sm:$0xff]
    %v63 = vld [vmem:[%s0 + $0x40] sm:$0xff]
    %v64 = vld [vmem:[%s0 + $0x48] sm:$0xff]
    %v65 = vld [vmem:[%s0 + $0x50] sm:$0xff]
    %v66 = vld [vmem:[%s0 + $0x58] sm:$0xff]
    %v67 = vld [vmem:[%s0 + $0x60] sm:$0xff]
    %v68 = vld [vmem:[%s0 + $0x68] sm:$0xff]
    %v69 = vpack.c.bf16 %v62, %v55
    %v70 = vpack.c.bf16 %v63, %v56
    %v71 = vpack.c.bf16 %v64, %v57
    %v72 = vpack.c.bf16 %v65, %v58
    %v73 = vpack.c.bf16 %v66, %v59
    %v74 = vpack.c.bf16 %v67, %v60
    %v75 = vpack.c.bf16 %v68, %v61
    %v76 = vld [vmem:[#allocation2] sm:$0xff]
    %v77 = vld [vmem:[#allocation2 + $0x8] sm:$0xff]
    %v78 = vld [vmem:[#allocation2 + $0x10] sm:$0xff]
    %v79 = vld [vmem:[#allocation2 + $0x18] sm:$0xff]
    %v80 = vld [vmem:[#allocation2 + $0x20] sm:$0xff]
    %v81 = vld [vmem:[#allocation2 + $0x28] sm:$0xff]
    %v82 = vld [vmem:[#allocation2 + $0x30] sm:$0xff]
    %v83 = vld [vmem:[#allocation2 + $0x38] sm:$0xff]
    %v84 = vld [vmem:[#allocation2 + $0x40] sm:$0xff]
    %v85 = vld [vmem:[#allocation2 + $0x48] sm:$0xff]
    %v86 = vld [vmem:[#allocation2 + $0x50] sm:$0xff]
    %v87 = vld [vmem:[#allocation2 + $0x58] sm:$0xff]
    %v88 = vld [vmem:[#allocation2 + $0x60] sm:$0xff]
    %v89 = vld [vmem:[#allocation2 + $0x68] sm:$0xff]
    %v90 = vld [vmem:[#allocation2 + $0x70] sm:$0xff]
    %v91 = vld [vmem:[#allocation2 + $0x78] sm:$0xff]
    %v92 = vld [vmem:[#allocation2 + $0x80] sm:$0xff]
    %v93 = vld [vmem:[#allocation2 + $0x88] sm:$0xff]
    %v94 = vld [vmem:[#allocation2 + $0x90] sm:$0xff]
    %v95 = vld [vmem:[#allocation2 + $0x98] sm:$0xff]
    %v96 = vld [vmem:[#allocation2 + $0xa0] sm:$0xff]
    %v97 = vld [vmem:[#allocation2 + $0xa8] sm:$0xff]
    %v98 = vld [vmem:[#allocation2 + $0xb0] sm:$0xff]
    %v99 = vld [vmem:[#allocation2 + $0xb8] sm:$0xff]
    %v100 = vld [vmem:[#allocation2 + $0xc0] sm:$0xff]
    %v101 = vld [vmem:[#allocation2 + $0xc8] sm:$0xff]
    %v102 = vld [vmem:[#allocation2 + $0xd0] sm:$0xff]
    %v103 = vld [vmem:[#allocation2 + $0xd8] sm:$0xff]
    %v104 = vld [vmem:[#allocation2 + $0xe0] sm:$0xff]
    %v105 = vld [vmem:[#allocation2 + $0xe8] sm:$0xff]
    %v106 = vld [vmem:[#allocation2 + $0xf0] sm:$0xff]
    %v107 = vld [vmem:[#allocation2 + $0xf8] sm:$0xff]
    %v108 = vld [vmem:[#allocation2 + $0x100] sm:$0xff]
    %v109 = vld [vmem:[#allocation2 + $0x108] sm:$0xff]
    %v110 = vld [vmem:[#allocation2 + $0x110] sm:$0xff]
    %v111 = vld [vmem:[#allocation2 + $0x118] sm:$0xff]
    %v112 = vld [vmem:[#allocation2 + $0x120] sm:$0xff]
    %v113 = vld [vmem:[#allocation2 + $0x128] sm:$0xff]
    %v114 = vld [vmem:[#allocation2 + $0x130] sm:$0xff]
    %v115 = vld [vmem:[#allocation2 + $0x138] sm:$0xff]
    %v116 = vld [vmem:[#allocation2 + $0x140] sm:$0xff]
    %v117 = vld [vmem:[#allocation2 + $0x148] sm:$0xff]
    %v118 = vld [vmem:[#allocation2 + $0x150] sm:$0xff]
    %v119 = vld [vmem:[#allocation2 + $0x158] sm:$0xff]
    %v120 = vld [vmem:[#allocation2 + $0x160] sm:$0xff]
    %v121 = vld [vmem:[#allocation2 + $0x168] sm:$0xff]
    %v122 = vld [vmem:[#allocation2 + $0x170] sm:$0xff]
    %v123 = vld [vmem:[#allocation2 + $0x178] sm:$0xff]
    %v124 = vld [vmem:[#allocation2 + $0x180] sm:$0xff]
    %v125 = vld [vmem:[#allocation2 + $0x188] sm:$0xff]
    %v126 = vld [vmem:[#allocation2 + $0x190] sm:$0xff]
    %v127 = vld [vmem:[#allocation2 + $0x198] sm:$0xff]
    %v128 = vld [vmem:[#allocation2 + $0x1a0] sm:$0xff]
    %v129 = vld [vmem:[#allocation2 + $0x1a8] sm:$0xff]
    %v130 = vld [vmem:[#allocation2 + $0x1b0] sm:$0xff]
    %v131 = vld [vmem:[#allocation2 + $0x1b8] sm:$0xff]
    %v132 = vld [vmem:[#allocation2 + $0x1c0] sm:$0xff]
    %v133 = vld [vmem:[#allocation2 + $0x1c8] sm:$0xff]
    %v134 = vld [vmem:[#allocation2 + $0x1d0] sm:$0xff]
    %v135 = vld [vmem:[#allocation2 + $0x1d8] sm:$0xff]
    %v136 = vld [vmem:[#allocation2 + $0x1e0] sm:$0xff]
    %v137 = vld [vmem:[#allocation2 + $0x1e8] sm:$0xff]
    %v138 = vld [vmem:[#allocation2 + $0x1f0] sm:$0xff]
    %v139 = vld [vmem:[#allocation2 + $0x1f8] sm:$0xff]
    %v140 = vld [vmem:[#allocation2 + $0x200] sm:$0xff]
    %v141 = vld [vmem:[#allocation2 + $0x208] sm:$0xff]
    %v142 = vld [vmem:[#allocation2 + $0x210] sm:$0xff]
    %v143 = vld [vmem:[#allocation2 + $0x218] sm:$0xff]
    %v144 = vld [vmem:[#allocation2 + $0x220] sm:$0xff]
    %v145 = vld [vmem:[#allocation2 + $0x228] sm:$0xff]
    %v146 = vld [vmem:[#allocation2 + $0x230] sm:$0xff]
    %v147 = vld [vmem:[#allocation2 + $0x238] sm:$0xff]
    %v148 = vld [vmem:[#allocation2 + $0x240] sm:$0xff]
    %v149 = vld [vmem:[#allocation2 + $0x248] sm:$0xff]
    %v150 = vld [vmem:[#allocation2 + $0x250] sm:$0xff]
    %v151 = vld [vmem:[#allocation2 + $0x258] sm:$0xff]
    %v152 = vld [vmem:[#allocation2 + $0x260] sm:$0xff]
    %v153 = vld [vmem:[#allocation2 + $0x268] sm:$0xff]
    %v154 = vld [vmem:[#allocation2 + $0x270] sm:$0xff]
    %v155 = vld [vmem:[#allocation2 + $0x278] sm:$0xff]
    %v156 = vld [vmem:[#allocation2 + $0x280] sm:$0xff]
    %v157 = vld [vmem:[#allocation2 + $0x288] sm:$0xff]
    %v158 = vld [vmem:[#allocation2 + $0x290] sm:$0xff]
    %v159 = vld [vmem:[#allocation2 + $0x298] sm:$0xff]
    %v160 = vld [vmem:[#allocation2 + $0x2a0] sm:$0xff]
    %v161 = vld [vmem:[#allocation2 + $0x2a8] sm:$0xff]
    %v162 = vld [vmem:[#allocation2 + $0x2b0] sm:$0xff]
    %v163 = vld [vmem:[#allocation2 + $0x2b8] sm:$0xff]
    %v164 = vld [vmem:[#allocation2 + $0x2c0] sm:$0xff]
    %v165 = vld [vmem:[#allocation2 + $0x2c8] sm:$0xff]
    %v166 = vld [vmem:[#allocation2 + $0x2d0] sm:$0xff]
    %v167 = vld [vmem:[#allocation2 + $0x2d8] sm:$0xff]
    %v168 = vld [vmem:[#allocation2 + $0x2e0] sm:$0xff]
    %v169 = vld [vmem:[#allocation2 + $0x2e8] sm:$0xff]
    %v170 = vld [vmem:[#allocation2 + $0x2f0] sm:$0xff]
    %v171 = vld [vmem:[#allocation2 + $0x2f8] sm:$0xff]
    %v172 = vld [vmem:[#allocation2 + $0x300] sm:$0xff]
    %v173 = vld [vmem:[#allocation2 + $0x308] sm:$0xff]
    %v174 = vld [vmem:[#allocation2 + $0x310] sm:$0xff]
    %v175 = vld [vmem:[#allocation2 + $0x318] sm:$0xff]
    %v176 = vld [vmem:[#allocation2 + $0x320] sm:$0xff]
    %v177 = vld [vmem:[#allocation2 + $0x328] sm:$0xff]
    %v178 = vld [vmem:[#allocation2 + $0x330] sm:$0xff]
    %v179 = vld [vmem:[#allocation2 + $0x338] sm:$0xff]
    %v180 = vld [vmem:[#allocation2 + $0x340] sm:$0xff]
    %v181 = vld [vmem:[#allocation2 + $0x348] sm:$0xff]
    %v182 = vld [vmem:[#allocation2 + $0x350] sm:$0xff]
    %v183 = vld [vmem:[#allocation2 + $0x358] sm:$0xff]
    %v184 = vld [vmem:[#allocation2 + $0x360] sm:$0xff]
    %v185 = vld [vmem:[#allocation2 + $0x368] sm:$0xff]
    %v186 = vld [vmem:[#allocation2 + $0x370] sm:$0xff]
    %v187 = vld [vmem:[#allocation2 + $0x378] sm:$0xff]
    %v188 = vld [vmem:[#allocation2 + $0x380] sm:$0xff]
    %v189 = vld [vmem:[#allocation2 + $0x388] sm:$0xff]
    %v190 = vld [vmem:[#allocation2 + $0x390] sm:$0xff]
    %v191 = vld [vmem:[#allocation2 + $0x398] sm:$0xff]
    %v192 = vld [vmem:[#allocation2 + $0x3a0] sm:$0xff]
    %v193 = vld [vmem:[#allocation2 + $0x3a8] sm:$0xff]
    %v194 = vld [vmem:[#allocation2 + $0x3b0] sm:$0xff]
    %v195 = vld [vmem:[#allocation2 + $0x3b8] sm:$0xff]
    %v196 = vld [vmem:[#allocation2 + $0x3c0] sm:$0xff]
    %v197 = vld [vmem:[#allocation2 + $0x3c8] sm:$0xff]
    %v198 = vld [vmem:[#allocation2 + $0x3d0] sm:$0xff]
    %v199 = vld [vmem:[#allocation2 + $0x3d8] sm:$0xff]
    %v200 = vld [vmem:[#allocation2 + $0x3e0] sm:$0xff]
    %v201 = vld [vmem:[#allocation2 + $0x3e8] sm:$0xff]
    %v202 = vld [vmem:[#allocation2 + $0x3f0] sm:$0xff]
    %v203 = vld [vmem:[#allocation2 + $0x3f8] sm:$0xff]
    %v204 = vld [vmem:[#allocation2 + $0x400] sm:$0xff]
    %v205 = vld [vmem:[#allocation2 + $0x408] sm:$0xff]
    %v206 = vld [vmem:[#allocation2 + $0x410] sm:$0xff]
    %v207 = vld [vmem:[#allocation2 + $0x418] sm:$0xff]
    %v208 = vld [vmem:[#allocation2 + $0x420] sm:$0xff]
    %v209 = vld [vmem:[#allocation2 + $0x428] sm:$0xff]
    %v210 = vld [vmem:[#allocation2 + $0x430] sm:$0xff]
    %v211 = vld [vmem:[#allocation2 + $0x438] sm:$0xff]
    %v212 = vld [vmem:[#allocation2 + $0x440] sm:$0xff]
    %v213 = vld [vmem:[#allocation2 + $0x448] sm:$0xff]
    %v214 = vld [vmem:[#allocation2 + $0x450] sm:$0xff]
    %v215 = vld [vmem:[#allocation2 + $0x458] sm:$0xff]
    %v216 = vld [vmem:[#allocation2 + $0x460] sm:$0xff]
    %v217 = vld [vmem:[#allocation2 + $0x468] sm:$0xff]
    %v218 = vld [vmem:[#allocation2 + $0x470] sm:$0xff]
    %v219 = vld [vmem:[#allocation2 + $0x478] sm:$0xff]
    %v220 = vld [vmem:[#allocation2 + $0x480] sm:$0xff]
    %v221 = vld [vmem:[#allocation2 + $0x488] sm:$0xff]
    %v222 = vld [vmem:[#allocation2 + $0x490] sm:$0xff]
    %v223 = vld [vmem:[#allocation2 + $0x498] sm:$0xff]
    %v224 = vld [vmem:[#allocation2 + $0x4a0] sm:$0xff]
    %v225 = vld [vmem:[#allocation2 + $0x4a8] sm:$0xff]
    %v226 = vld [vmem:[#allocation2 + $0x4b0] sm:$0xff]
    %v227 = vld [vmem:[#allocation2 + $0x4b8] sm:$0xff]
    %v228 = vld [vmem:[#allocation2 + $0x4c0] sm:$0xff]
    %v229 = vld [vmem:[#allocation2 + $0x4c8] sm:$0xff]
    %v230 = vld [vmem:[#allocation2 + $0x4d0] sm:$0xff]
    %v231 = vld [vmem:[#allocation2 + $0x4d8] sm:$0xff]
    %v232 = vld [vmem:[#allocation2 + $0x4e0] sm:$0xff]
    %v233 = vld [vmem:[#allocation2 + $0x4e8] sm:$0xff]
    %v234 = vld [vmem:[#allocation2 + $0x4f0] sm:$0xff]
    %v235 = vld [vmem:[#allocation2 + $0x4f8] sm:$0xff]
    %v236 = vld [vmem:[#allocation2 + $0x500] sm:$0xff]
    %v237 = vld [vmem:[#allocation2 + $0x508] sm:$0xff]
    %v238 = vld [vmem:[#allocation2 + $0x510] sm:$0xff]
    %v239 = vld [vmem:[#allocation2 + $0x518] sm:$0xff]
    %v240 = vld [vmem:[#allocation2 + $0x520] sm:$0xff]
    %v241 = vld [vmem:[#allocation2 + $0x528] sm:$0xff]
    %v242 = vld [vmem:[#allocation2 + $0x530] sm:$0xff]
    %v243 = vld [vmem:[#allocation2 + $0x538] sm:$0xff]
    %v244 = vld [vmem:[#allocation2 + $0x540] sm:$0xff]
    %v245 = vld [vmem:[#allocation2 + $0x548] sm:$0xff]
    %v246 = vld [vmem:[#allocation2 + $0x550] sm:$0xff]
    %v247 = vld [vmem:[#allocation2 + $0x558] sm:$0xff]
    %v248 = vld [vmem:[#allocation2 + $0x560] sm:$0xff]
    %v249 = vld [vmem:[#allocation2 + $0x568] sm:$0xff]
    %v250 = vld [vmem:[#allocation2 + $0x570] sm:$0xff]
    %v251 = vld [vmem:[#allocation2 + $0x578] sm:$0xff]
    %v252 = vld [vmem:[#allocation2 + $0x580] sm:$0xff]
    %v253 = vld [vmem:[#allocation2 + $0x588] sm:$0xff]
    %v254 = vld [vmem:[#allocation2 + $0x590] sm:$0xff]
    %v255 = vld [vmem:[#allocation2 + $0x598] sm:$0xff]
    %v256 = vld [vmem:[#allocation2 + $0x5a0] sm:$0xff]
    %v257 = vld [vmem:[#allocation2 + $0x5a8] sm:$0xff]
    %v258 = vld [vmem:[#allocation2 + $0x5b0] sm:$0xff]
    %v259 = vld [vmem:[#allocation2 + $0x5b8] sm:$0xff]
    %v260 = vld [vmem:[#allocation2 + $0x5c0] sm:$0xff]
    %v261 = vld [vmem:[#allocation2 + $0x5c8] sm:$0xff]
    %v262 = vld [vmem:[#allocation2 + $0x5d0] sm:$0xff]
    %v263 = vld [vmem:[#allocation2 + $0x5d8] sm:$0xff]
    %v264 = vld [vmem:[#allocation2 + $0x5e0] sm:$0xff]
    %v265 = vld [vmem:[#allocation2 + $0x5e8] sm:$0xff]
    %v266 = vld [vmem:[#allocation2 + $0x5f0] sm:$0xff]
    %v267 = vld [vmem:[#allocation2 + $0x5f8] sm:$0xff]
    %v268 = vld [vmem:[#allocation2 + $0x600] sm:$0xff]
    %v269 = vld [vmem:[#allocation2 + $0x608] sm:$0xff]
    %v270 = vld [vmem:[#allocation2 + $0x610] sm:$0xff]
    %v271 = vld [vmem:[#allocation2 + $0x618] sm:$0xff]
    %v272 = vld [vmem:[%s2] sm:$0xf]
    %v274 = vlaneseq
    %v275 = vshrl.u32 %v274, 7
    %v276 = vsub.s32 0, %v275
    %v277 = vrot.slane %v272, %v276
    %v278 = vlaneseq
    %v279 = vshrl.u32 %v278, 7
    %v280 = vsub.s32 1, %v279
    %v281 = vrot.slane %v272, %v280
    %v282 = vlaneseq
    %v283 = vshrl.u32 %v282, 7
    %v284 = vsub.s32 2, %v283
    %v285 = vrot.slane %v272, %v284
    %v286 = vlaneseq
    %v287 = vshrl.u32 %v286, 7
    %v288 = vsub.s32 3, %v287
    %v289 = vrot.slane %v272, %v288
    %v490 = vunpack.c.l.b16 %v76
    %v491 = vunpack.c.h.b16 %v76
    %v492 = vunpack.c.l.b16 %v77
    %v493 = vunpack.c.h.b16 %v77
    %v494 = vunpack.c.l.b16 %v78
    %v495 = vunpack.c.h.b16 %v78
    %v496 = vunpack.c.l.b16 %v79
    %v497 = vunpack.c.h.b16 %v79
    %v498 = vunpack.c.l.b16 %v80
    %v499 = vunpack.c.h.b16 %v80
    %v500 = vunpack.c.l.b16 %v81
    %v501 = vunpack.c.h.b16 %v81
    %v502 = vunpack.c.l.b16 %v82
    %v503 = vunpack.c.h.b16 %v82
    %v504 = vunpack.c.l.b16 %v83
    %v505 = vunpack.c.h.b16 %v83
    %v506 = vunpack.c.l.b16 %v84
    %v507 = vunpack.c.h.b16 %v84
    %v508 = vunpack.c.l.b16 %v85
    %v509 = vunpack.c.h.b16 %v85
    %v510 = vunpack.c.l.b16 %v86
    %v511 = vunpack.c.h.b16 %v86
    %v512 = vunpack.c.l.b16 %v87
    %v513 = vunpack.c.h.b16 %v87
    %v514 = vunpack.c.l.b16 %v88
    %v515 = vunpack.c.h.b16 %v88
    %v516 = vunpack.c.l.b16 %v89
    %v517 = vunpack.c.h.b16 %v89
    %v518 = vunpack.c.l.b16 %v90
    %v519 = vunpack.c.h.b16 %v90
    %v520 = vunpack.c.l.b16 %v91
    %v521 = vunpack.c.h.b16 %v91
    %v522 = vunpack.c.l.b16 %v92
    %v523 = vunpack.c.h.b16 %v92
    %v524 = vunpack.c.l.b16 %v93
    %v525 = vunpack.c.h.b16 %v93
    %v526 = vunpack.c.l.b16 %v94
    %v527 = vunpack.c.h.b16 %v94
    %v528 = vunpack.c.l.b16 %v95
    %v529 = vunpack.c.h.b16 %v95
    %v530 = vunpack.c.l.b16 %v96
    %v531 = vunpack.c.h.b16 %v96
    %v532 = vunpack.c.l.b16 %v97
    %v533 = vunpack.c.h.b16 %v97
    %v534 = vunpack.c.l.b16 %v98
    %v535 = vunpack.c.h.b16 %v98
    %v536 = vunpack.c.l.b16 %v99
    %v537 = vunpack.c.h.b16 %v99
    %v538 = vunpack.c.l.b16 %v100
    %v539 = vunpack.c.h.b16 %v100
    %v540 = vunpack.c.l.b16 %v101
    %v541 = vunpack.c.h.b16 %v101
    %v542 = vunpack.c.l.b16 %v102
    %v543 = vunpack.c.h.b16 %v102
    %v544 = vunpack.c.l.b16 %v103
    %v545 = vunpack.c.h.b16 %v103
    %v546 = vunpack.c.l.b16 %v104
    %v547 = vunpack.c.h.b16 %v104
    %v548 = vunpack.c.l.b16 %v105
    %v549 = vunpack.c.h.b16 %v105
    %v550 = vunpack.c.l.b16 %v106
    %v551 = vunpack.c.h.b16 %v106
    %v552 = vunpack.c.l.b16 %v107
    %v553 = vunpack.c.h.b16 %v107
    %v554 = vunpack.c.l.b16 %v108
    %v555 = vunpack.c.h.b16 %v108
    %v556 = vunpack.c.l.b16 %v109
    %v557 = vunpack.c.h.b16 %v109
    %v558 = vunpack.c.l.b16 %v110
    %v559 = vunpack.c.h.b16 %v110
    %v560 = vunpack.c.l.b16 %v111
    %v561 = vunpack.c.h.b16 %v111
    %v562 = vunpack.c.l.b16 %v112
    %v563 = vunpack.c.h.b16 %v112
    %v564 = vunpack.c.l.b16 %v113
    %v565 = vunpack.c.h.b16 %v113
    %v566 = vunpack.c.l.b16 %v114
    %v567 = vunpack.c.h.b16 %v114
    %v568 = vunpack.c.l.b16 %v115
    %v569 = vunpack.c.h.b16 %v115
    %v570 = vunpack.c.l.b16 %v116
    %v571 = vunpack.c.h.b16 %v116
    %v572 = vunpack.c.l.b16 %v117
    %v573 = vunpack.c.h.b16 %v117
    %v574 = vunpack.c.l.b16 %v118
    %v575 = vunpack.c.h.b16 %v118
    %v576 = vunpack.c.l.b16 %v119
    %v577 = vunpack.c.h.b16 %v119
    %v578 = vunpack.c.l.b16 %v120
    %v579 = vunpack.c.h.b16 %v120
    %v580 = vunpack.c.l.b16 %v121
    %v581 = vunpack.c.h.b16 %v121
    %v582 = vunpack.c.l.b16 %v122
    %v583 = vunpack.c.h.b16 %v122
    %v584 = vunpack.c.l.b16 %v123
    %v585 = vunpack.c.h.b16 %v123
    %v586 = vunpack.c.l.b16 %v124
    %v587 = vunpack.c.h.b16 %v124
    %v588 = vunpack.c.l.b16 %v125
    %v589 = vunpack.c.h.b16 %v125
    %v590 = vunpack.c.l.b16 %v126
    %v591 = vunpack.c.h.b16 %v126
    %v592 = vunpack.c.l.b16 %v127
    %v593 = vunpack.c.h.b16 %v127
    %v594 = vunpack.c.l.b16 %v128
    %v595 = vunpack.c.h.b16 %v128
    %v596 = vunpack.c.l.b16 %v129
    %v597 = vunpack.c.h.b16 %v129
    %v598 = vunpack.c.l.b16 %v130
    %v599 = vunpack.c.h.b16 %v130
    %v600 = vunpack.c.l.b16 %v131
    %v601 = vunpack.c.h.b16 %v131
    %v602 = vunpack.c.l.b16 %v132
    %v603 = vunpack.c.h.b16 %v132
    %v604 = vunpack.c.l.b16 %v133
    %v605 = vunpack.c.h.b16 %v133
    %v606 = vunpack.c.l.b16 %v134
    %v607 = vunpack.c.h.b16 %v134
    %v608 = vunpack.c.l.b16 %v135
    %v609 = vunpack.c.h.b16 %v135
    %v610 = vunpack.c.l.b16 %v136
    %v611 = vunpack.c.h.b16 %v136
    %v612 = vunpack.c.l.b16 %v137
    %v613 = vunpack.c.h.b16 %v137
    %v614 = vunpack.c.l.b16 %v138
    %v615 = vunpack.c.h.b16 %v138
    %v616 = vunpack.c.l.b16 %v139
    %v617 = vunpack.c.h.b16 %v139
    %v618 = vunpack.c.l.b16 %v140
    %v619 = vunpack.c.h.b16 %v140
    %v620 = vunpack.c.l.b16 %v141
    %v621 = vunpack.c.h.b16 %v141
    %v622 = vunpack.c.l.b16 %v142
    %v623 = vunpack.c.h.b16 %v142
    %v624 = vunpack.c.l.b16 %v143
    %v625 = vunpack.c.h.b16 %v143
    %v626 = vunpack.c.l.b16 %v144
    %v627 = vunpack.c.h.b16 %v144
    %v628 = vunpack.c.l.b16 %v145
    %v629 = vunpack.c.h.b16 %v145
    %v630 = vunpack.c.l.b16 %v146
    %v631 = vunpack.c.h.b16 %v146
    %v632 = vunpack.c.l.b16 %v147
    %v633 = vunpack.c.h.b16 %v147
    %v634 = vunpack.c.l.b16 %v148
    %v635 = vunpack.c.h.b16 %v148
    %v636 = vunpack.c.l.b16 %v149
    %v637 = vunpack.c.h.b16 %v149
    %v638 = vunpack.c.l.b16 %v150
    %v639 = vunpack.c.h.b16 %v150
    %v640 = vunpack.c.l.b16 %v151
    %v641 = vunpack.c.h.b16 %v151
    %v642 = vunpack.c.l.b16 %v152
    %v643 = vunpack.c.h.b16 %v152
    %v644 = vunpack.c.l.b16 %v153
    %v645 = vunpack.c.h.b16 %v153
    %v646 = vunpack.c.l.b16 %v154
    %v647 = vunpack.c.h.b16 %v154
    %v648 = vunpack.c.l.b16 %v155
    %v649 = vunpack.c.h.b16 %v155
    %v650 = vunpack.c.l.b16 %v156
    %v651 = vunpack.c.h.b16 %v156
    %v652 = vunpack.c.l.b16 %v157
    %v653 = vunpack.c.h.b16 %v157
    %v654 = vunpack.c.l.b16 %v158
    %v655 = vunpack.c.h.b16 %v158
    %v656 = vunpack.c.l.b16 %v159
    %v657 = vunpack.c.h.b16 %v159
    %v658 = vunpack.c.l.b16 %v160
    %v659 = vunpack.c.h.b16 %v160
    %v660 = vunpack.c.l.b16 %v161
    %v661 = vunpack.c.h.b16 %v161
    %v662 = vunpack.c.l.b16 %v162
    %v663 = vunpack.c.h.b16 %v162
    %v664 = vunpack.c.l.b16 %v163
    %v665 = vunpack.c.h.b16 %v163
    %v666 = vunpack.c.l.b16 %v164
    %v667 = vunpack.c.h.b16 %v164
    %v668 = vunpack.c.l.b16 %v165
    %v669 = vunpack.c.h.b16 %v165
    %v670 = vunpack.c.l.b16 %v166
    %v671 = vunpack.c.h.b16 %v166
    %v672 = vunpack.c.l.b16 %v167
    %v673 = vunpack.c.h.b16 %v167
    %v674 = vunpack.c.l.b16 %v168
    %v675 = vunpack.c.h.b16 %v168
    %v676 = vunpack.c.l.b16 %v169
    %v677 = vunpack.c.h.b16 %v169
    %v678 = vunpack.c.l.b16 %v170
    %v679 = vunpack.c.h.b16 %v170
    %v680 = vunpack.c.l.b16 %v171
    %v681 = vunpack.c.h.b16 %v171
    %v682 = vunpack.c.l.b16 %v172
    %v683 = vunpack.c.h.b16 %v172
    %v684 = vunpack.c.l.b16 %v173
    %v685 = vunpack.c.h.b16 %v173
    %v686 = vunpack.c.l.b16 %v174
    %v687 = vunpack.c.h.b16 %v174
    %v688 = vunpack.c.l.b16 %v175
    %v689 = vunpack.c.h.b16 %v175
    %v690 = vunpack.c.l.b16 %v176
    %v691 = vunpack.c.h.b16 %v176
    %v692 = vunpack.c.l.b16 %v177
    %v693 = vunpack.c.h.b16 %v177
    %v694 = vunpack.c.l.b16 %v178
    %v695 = vunpack.c.h.b16 %v178
    %v696 = vunpack.c.l.b16 %v179
    %v697 = vunpack.c.h.b16 %v179
    %v698 = vunpack.c.l.b16 %v180
    %v699 = vunpack.c.h.b16 %v180
    %v700 = vunpack.c.l.b16 %v181
    %v701 = vunpack.c.h.b16 %v181
    %v702 = vunpack.c.l.b16 %v182
    %v703 = vunpack.c.h.b16 %v182
    %v704 = vunpack.c.l.b16 %v183
    %v705 = vunpack.c.h.b16 %v183
    %v706 = vunpack.c.l.b16 %v184
    %v707 = vunpack.c.h.b16 %v184
    %v708 = vunpack.c.l.b16 %v185
    %v709 = vunpack.c.h.b16 %v185
    %v710 = vunpack.c.l.b16 %v186
    %v711 = vunpack.c.h.b16 %v186
    %v712 = vunpack.c.l.b16 %v187
    %v713 = vunpack.c.h.b16 %v187
    %v714 = vunpack.c.l.b16 %v188
    %v715 = vunpack.c.h.b16 %v188
    %v716 = vunpack.c.l.b16 %v189
    %v717 = vunpack.c.h.b16 %v189
    %v718 = vunpack.c.l.b16 %v190
    %v719 = vunpack.c.h.b16 %v190
    %v720 = vunpack.c.l.b16 %v191
    %v721 = vunpack.c.h.b16 %v191
    %v722 = vunpack.c.l.b16 %v192
    %v723 = vunpack.c.h.b16 %v192
    %v724 = vunpack.c.l.b16 %v193
    %v725 = vunpack.c.h.b16 %v193
    %v726 = vunpack.c.l.b16 %v194
    %v727 = vunpack.c.h.b16 %v194
    %v728 = vunpack.c.l.b16 %v195
    %v729 = vunpack.c.h.b16 %v195
    %v730 = vunpack.c.l.b16 %v196
    %v731 = vunpack.c.h.b16 %v196
    %v732 = vunpack.c.l.b16 %v197
    %v733 = vunpack.c.h.b16 %v197
    %v734 = vunpack.c.l.b16 %v198
    %v735 = vunpack.c.h.b16 %v198
    %v736 = vunpack.c.l.b16 %v199
    %v737 = vunpack.c.h.b16 %v199
    %v738 = vunpack.c.l.b16 %v200
    %v739 = vunpack.c.h.b16 %v200
    %v740 = vunpack.c.l.b16 %v201
    %v741 = vunpack.c.h.b16 %v201
    %v742 = vunpack.c.l.b16 %v202
    %v743 = vunpack.c.h.b16 %v202
    %v744 = vunpack.c.l.b16 %v203
    %v745 = vunpack.c.h.b16 %v203
    %v746 = vunpack.c.l.b16 %v204
    %v747 = vunpack.c.h.b16 %v204
    %v748 = vunpack.c.l.b16 %v205
    %v749 = vunpack.c.h.b16 %v205
    %v750 = vunpack.c.l.b16 %v206
    %v751 = vunpack.c.h.b16 %v206
    %v752 = vunpack.c.l.b16 %v207
    %v753 = vunpack.c.h.b16 %v207
    %v754 = vunpack.c.l.b16 %v208
    %v755 = vunpack.c.h.b16 %v208
    %v756 = vunpack.c.l.b16 %v209
    %v757 = vunpack.c.h.b16 %v209
    %v758 = vunpack.c.l.b16 %v210
    %v759 = vunpack.c.h.b16 %v210
    %v760 = vunpack.c.l.b16 %v211
    %v761 = vunpack.c.h.b16 %v211
    %v762 = vunpack.c.l.b16 %v212
    %v763 = vunpack.c.h.b16 %v212
    %v764 = vunpack.c.l.b16 %v213
    %v765 = vunpack.c.h.b16 %v213
    %v766 = vunpack.c.l.b16 %v214
    %v767 = vunpack.c.h.b16 %v214
    %v768 = vunpack.c.l.b16 %v215
    %v769 = vunpack.c.h.b16 %v215
    %v770 = vunpack.c.l.b16 %v216
    %v771 = vunpack.c.h.b16 %v216
    %v772 = vunpack.c.l.b16 %v217
    %v773 = vunpack.c.h.b16 %v217
    %v774 = vunpack.c.l.b16 %v218
    %v775 = vunpack.c.h.b16 %v218
    %v776 = vunpack.c.l.b16 %v219
    %v777 = vunpack.c.h.b16 %v219
    %v778 = vunpack.c.l.b16 %v220
    %v779 = vunpack.c.h.b16 %v220
    %v780 = vunpack.c.l.b16 %v221
    %v781 = vunpack.c.h.b16 %v221
    %v782 = vunpack.c.l.b16 %v222
    %v783 = vunpack.c.h.b16 %v222
    %v784 = vunpack.c.l.b16 %v223
    %v785 = vunpack.c.h.b16 %v223
    %v786 = vunpack.c.l.b16 %v224
    %v787 = vunpack.c.h.b16 %v224
    %v788 = vunpack.c.l.b16 %v225
    %v789 = vunpack.c.h.b16 %v225
    %v790 = vunpack.c.l.b16 %v226
    %v791 = vunpack.c.h.b16 %v226
    %v792 = vunpack.c.l.b16 %v227
    %v793 = vunpack.c.h.b16 %v227
    %v794 = vunpack.c.l.b16 %v228
    %v795 = vunpack.c.h.b16 %v228
    %v796 = vunpack.c.l.b16 %v229
    %v797 = vunpack.c.h.b16 %v229
    %v798 = vunpack.c.l.b16 %v230
    %v799 = vunpack.c.h.b16 %v230
    %v800 = vunpack.c.l.b16 %v231
    %v801 = vunpack.c.h.b16 %v231
    %v802 = vunpack.c.l.b16 %v232
    %v803 = vunpack.c.h.b16 %v232
    %v804 = vunpack.c.l.b16 %v233
    %v805 = vunpack.c.h.b16 %v233
    %v806 = vunpack.c.l.b16 %v234
    %v807 = vunpack.c.h.b16 %v234
    %v808 = vunpack.c.l.b16 %v235
    %v809 = vunpack.c.h.b16 %v235
    %v810 = vunpack.c.l.b16 %v236
    %v811 = vunpack.c.h.b16 %v236
    %v812 = vunpack.c.l.b16 %v237
    %v813 = vunpack.c.h.b16 %v237
    %v814 = vunpack.c.l.b16 %v238
    %v815 = vunpack.c.h.b16 %v238
    %v816 = vunpack.c.l.b16 %v239
    %v817 = vunpack.c.h.b16 %v239
    %v818 = vunpack.c.l.b16 %v240
    %v819 = vunpack.c.h.b16 %v240
    %v820 = vunpack.c.l.b16 %v241
    %v821 = vunpack.c.h.b16 %v241
    %v822 = vunpack.c.l.b16 %v242
    %v823 = vunpack.c.h.b16 %v242
    %v824 = vunpack.c.l.b16 %v243
    %v825 = vunpack.c.h.b16 %v243
    %v826 = vunpack.c.l.b16 %v244
    %v827 = vunpack.c.h.b16 %v244
    %v828 = vunpack.c.l.b16 %v245
    %v829 = vunpack.c.h.b16 %v245
    %v830 = vunpack.c.l.b16 %v246
    %v831 = vunpack.c.h.b16 %v246
    %v832 = vunpack.c.l.b16 %v247
    %v833 = vunpack.c.h.b16 %v247
    %v834 = vunpack.c.l.b16 %v248
    %v835 = vunpack.c.h.b16 %v248
    %v836 = vunpack.c.l.b16 %v249
    %v837 = vunpack.c.h.b16 %v249
    %v838 = vunpack.c.l.b16 %v250
    %v839 = vunpack.c.h.b16 %v250
    %v840 = vunpack.c.l.b16 %v251
    %v841 = vunpack.c.h.b16 %v251
    %v842 = vunpack.c.l.b16 %v252
    %v843 = vunpack.c.h.b16 %v252
    %v844 = vunpack.c.l.b16 %v253
    %v845 = vunpack.c.h.b16 %v253
    %v846 = vunpack.c.l.b16 %v254
    %v847 = vunpack.c.h.b16 %v254
    %v848 = vunpack.c.l.b16 %v255
    %v849 = vunpack.c.h.b16 %v255
    %v850 = vunpack.c.l.b16 %v256
    %v851 = vunpack.c.h.b16 %v256
    %v852 = vunpack.c.l.b16 %v257
    %v853 = vunpack.c.h.b16 %v257
    %v854 = vunpack.c.l.b16 %v258
    %v855 = vunpack.c.h.b16 %v258
    %v856 = vunpack.c.l.b16 %v259
    %v857 = vunpack.c.h.b16 %v259
    %v858 = vunpack.c.l.b16 %v260
    %v859 = vunpack.c.h.b16 %v260
    %v860 = vunpack.c.l.b16 %v261
    %v861 = vunpack.c.h.b16 %v261
    %v862 = vunpack.c.l.b16 %v262
    %v863 = vunpack.c.h.b16 %v262
    %v864 = vunpack.c.l.b16 %v263
    %v865 = vunpack.c.h.b16 %v263
    %v866 = vunpack.c.l.b16 %v264
    %v867 = vunpack.c.h.b16 %v264
    %v868 = vunpack.c.l.b16 %v265
    %v869 = vunpack.c.h.b16 %v265
    %v870 = vunpack.c.l.b16 %v266
    %v871 = vunpack.c.h.b16 %v266
    %v872 = vunpack.c.l.b16 %v267
    %v873 = vunpack.c.h.b16 %v267
    %v874 = vunpack.c.l.b16 %v268
    %v875 = vunpack.c.h.b16 %v268
    %v876 = vunpack.c.l.b16 %v269
    %v877 = vunpack.c.h.b16 %v269
    %v878 = vunpack.c.l.b16 %v270
    %v879 = vunpack.c.h.b16 %v270
    %v880 = vunpack.c.l.b16 %v271
    %v881 = vunpack.c.h.b16 %v271
    %v882 = vpack.c.b16 %v494, %v490
    %v883 = vpack.c.b16 %v495, %v491
    %v884 = vpack.c.b16 %v496, %v492
    %v885 = vpack.c.b16 %v497, %v493
    %v886 = vpack.c.b16 %v502, %v498
    %v887 = vpack.c.b16 %v503, %v499
    %v888 = vpack.c.b16 %v504, %v500
    %v889 = vpack.c.b16 %v505, %v501
    %v890 = vpack.c.b16 %v510, %v506
    %v891 = vpack.c.b16 %v511, %v507
    %v892 = vpack.c.b16 %v512, %v508
    %v893 = vpack.c.b16 %v513, %v509
    %v894 = vpack.c.b16 %v518, %v514
    %v895 = vpack.c.b16 %v519, %v515
    %v896 = vpack.c.b16 %v520, %v516
    %v897 = vpack.c.b16 %v521, %v517
    %v898 = vpack.c.b16 %v526, %v522
    %v899 = vpack.c.b16 %v527, %v523
    %v900 = vpack.c.b16 %v528, %v524
    %v901 = vpack.c.b16 %v529, %v525
    %v902 = vpack.c.b16 %v534, %v530
    %v903 = vpack.c.b16 %v535, %v531
    %v904 = vpack.c.b16 %v536, %v532
    %v905 = vpack.c.b16 %v537, %v533
    %v906 = vpack.c.b16 %v542, %v538
    %v907 = vpack.c.b16 %v543, %v539
    %v908 = vpack.c.b16 %v544, %v540
    %v909 = vpack.c.b16 %v545, %v541
    %v910 = vpack.c.b16 %v550, %v546
    %v911 = vpack.c.b16 %v551, %v547
    %v912 = vpack.c.b16 %v552, %v548
    %v913 = vpack.c.b16 %v553, %v549
    %v914 = vpack.c.b16 %v558, %v554
    %v915 = vpack.c.b16 %v559, %v555
    %v916 = vpack.c.b16 %v560, %v556
    %v917 = vpack.c.b16 %v561, %v557
    %v918 = vpack.c.b16 %v566, %v562
    %v919 = vpack.c.b16 %v567, %v563
    %v920 = vpack.c.b16 %v568, %v564
    %v921 = vpack.c.b16 %v569, %v565
    %v922 = vpack.c.b16 %v574, %v570
    %v923 = vpack.c.b16 %v575, %v571
    %v924 = vpack.c.b16 %v576, %v572
    %v925 = vpack.c.b16 %v577, %v573
    %v926 = vpack.c.b16 %v582, %v578
    %v927 = vpack.c.b16 %v583, %v579
    %v928 = vpack.c.b16 %v584, %v580
    %v929 = vpack.c.b16 %v585, %v581
    %v930 = vpack.c.b16 %v590, %v586
    %v931 = vpack.c.b16 %v591, %v587
    %v932 = vpack.c.b16 %v592, %v588
    %v933 = vpack.c.b16 %v593, %v589
    %v934 = vpack.c.b16 %v598, %v594
    %v935 = vpack.c.b16 %v599, %v595
    %v936 = vpack.c.b16 %v600, %v596
    %v937 = vpack.c.b16 %v601, %v597
    %v938 = vpack.c.b16 %v606, %v602
    %v939 = vpack.c.b16 %v607, %v603
    %v940 = vpack.c.b16 %v608, %v604
    %v941 = vpack.c.b16 %v609, %v605
    %v942 = vpack.c.b16 %v614, %v610
    %v943 = vpack.c.b16 %v615, %v611
    %v944 = vpack.c.b16 %v616, %v612
    %v945 = vpack.c.b16 %v617, %v613
    %v946 = vpack.c.b16 %v622, %v618
    %v947 = vpack.c.b16 %v623, %v619
    %v948 = vpack.c.b16 %v624, %v620
    %v949 = vpack.c.b16 %v625, %v621
    %v950 = vpack.c.b16 %v630, %v626
    %v951 = vpack.c.b16 %v631, %v627
    %v952 = vpack.c.b16 %v632, %v628
    %v953 = vpack.c.b16 %v633, %v629
    %v954 = vpack.c.b16 %v638, %v634
    %v955 = vpack.c.b16 %v639, %v635
    %v956 = vpack.c.b16 %v640, %v636
    %v957 = vpack.c.b16 %v641, %v637
    %v958 = vpack.c.b16 %v646, %v642
    %v959 = vpack.c.b16 %v647, %v643
    %v960 = vpack.c.b16 %v648, %v644
    %v961 = vpack.c.b16 %v649, %v645
    %v962 = vpack.c.b16 %v654, %v650
    %v963 = vpack.c.b16 %v655, %v651
    %v964 = vpack.c.b16 %v656, %v652
    %v965 = vpack.c.b16 %v657, %v653
    %v966 = vpack.c.b16 %v662, %v658
    %v967 = vpack.c.b16 %v663, %v659
    %v968 = vpack.c.b16 %v664, %v660
    %v969 = vpack.c.b16 %v665, %v661
    %v970 = vpack.c.b16 %v670, %v666
    %v971 = vpack.c.b16 %v671, %v667
    %v972 = vpack.c.b16 %v672, %v668
    %v973 = vpack.c.b16 %v673, %v669
    %v974 = vpack.c.b16 %v678, %v674
    %v975 = vpack.c.b16 %v679, %v675
    %v976 = vpack.c.b16 %v680, %v676
    %v977 = vpack.c.b16 %v681, %v677
    %v978 = vpack.c.b16 %v686, %v682
    %v979 = vpack.c.b16 %v687, %v683
    %v980 = vpack.c.b16 %v688, %v684
    %v981 = vpack.c.b16 %v689, %v685
    %v982 = vpack.c.b16 %v694, %v690
    %v983 = vpack.c.b16 %v695, %v691
    %v984 = vpack.c.b16 %v696, %v692
    %v985 = vpack.c.b16 %v697, %v693
    %v986 = vpack.c.b16 %v702, %v698
    %v987 = vpack.c.b16 %v703, %v699
    %v988 = vpack.c.b16 %v704, %v700
    %v989 = vpack.c.b16 %v705, %v701
    %v990 = vpack.c.b16 %v710, %v706
    %v991 = vpack.c.b16 %v711, %v707
    %v992 = vpack.c.b16 %v712, %v708
    %v993 = vpack.c.b16 %v713, %v709
    %v994 = vpack.c.b16 %v718, %v714
    %v995 = vpack.c.b16 %v719, %v715
    %v996 = vpack.c.b16 %v720, %v716
    %v997 = vpack.c.b16 %v721, %v717
    %v998 = vpack.c.b16 %v726, %v722
    %v999 = vpack.c.b16 %v727, %v723
    %v1000 = vpack.c.b16 %v728, %v724
    %v1001 = vpack.c.b16 %v729, %v725
    %v1002 = vpack.c.b16 %v734, %v730
    %v1003 = vpack.c.b16 %v735, %v731
    %v1004 = vpack.c.b16 %v736, %v732
    %v1005 = vpack.c.b16 %v737, %v733
    %v1006 = vpack.c.b16 %v742, %v738
    %v1007 = vpack.c.b16 %v743, %v739
    %v1008 = vpack.c.b16 %v744, %v740
    %v1009 = vpack.c.b16 %v745, %v741
    %v1010 = vpack.c.b16 %v750, %v746
    %v1011 = vpack.c.b16 %v751, %v747
    %v1012 = vpack.c.b16 %v752, %v748
    %v1013 = vpack.c.b16 %v753, %v749
    %v1014 = vpack.c.b16 %v758, %v754
    %v1015 = vpack.c.b16 %v759, %v755
    %v1016 = vpack.c.b16 %v760, %v756
    %v1017 = vpack.c.b16 %v761, %v757
    %v1018 = vpack.c.b16 %v766, %v762
    %v1019 = vpack.c.b16 %v767, %v763
    %v1020 = vpack.c.b16 %v768, %v764
    %v1021 = vpack.c.b16 %v769, %v765
    %v1022 = vpack.c.b16 %v774, %v770
    %v1023 = vpack.c.b16 %v775, %v771
    %v1024 = vpack.c.b16 %v776, %v772
    %v1025 = vpack.c.b16 %v777, %v773
    %v1026 = vpack.c.b16 %v782, %v778
    %v1027 = vpack.c.b16 %v783, %v779
    %v1028 = vpack.c.b16 %v784, %v780
    %v1029 = vpack.c.b16 %v785, %v781
    %v1030 = vpack.c.b16 %v790, %v786
    %v1031 = vpack.c.b16 %v791, %v787
    %v1032 = vpack.c.b16 %v792, %v788
    %v1033 = vpack.c.b16 %v793, %v789
    %v1034 = vpack.c.b16 %v798, %v794
    %v1035 = vpack.c.b16 %v799, %v795
    %v1036 = vpack.c.b16 %v800, %v796
    %v1037 = vpack.c.b16 %v801, %v797
    %v1038 = vpack.c.b16 %v806, %v802
    %v1039 = vpack.c.b16 %v807, %v803
    %v1040 = vpack.c.b16 %v808, %v804
    %v1041 = vpack.c.b16 %v809, %v805
    %v1042 = vpack.c.b16 %v814, %v810
    %v1043 = vpack.c.b16 %v815, %v811
    %v1044 = vpack.c.b16 %v816, %v812
    %v1045 = vpack.c.b16 %v817, %v813
    %v1046 = vpack.c.b16 %v822, %v818
    %v1047 = vpack.c.b16 %v823, %v819
    %v1048 = vpack.c.b16 %v824, %v820
    %v1049 = vpack.c.b16 %v825, %v821
    %v1050 = vpack.c.b16 %v830, %v826
    %v1051 = vpack.c.b16 %v831, %v827
    %v1052 = vpack.c.b16 %v832, %v828
    %v1053 = vpack.c.b16 %v833, %v829
    %v1054 = vpack.c.b16 %v838, %v834
    %v1055 = vpack.c.b16 %v839, %v835
    %v1056 = vpack.c.b16 %v840, %v836
    %v1057 = vpack.c.b16 %v841, %v837
    %v1058 = vpack.c.b16 %v846, %v842
    %v1059 = vpack.c.b16 %v847, %v843
    %v1060 = vpack.c.b16 %v848, %v844
    %v1061 = vpack.c.b16 %v849, %v845
    %v1062 = vpack.c.b16 %v854, %v850
    %v1063 = vpack.c.b16 %v855, %v851
    %v1064 = vpack.c.b16 %v856, %v852
    %v1065 = vpack.c.b16 %v857, %v853
    %v1066 = vpack.c.b16 %v862, %v858
    %v1067 = vpack.c.b16 %v863, %v859
    %v1068 = vpack.c.b16 %v864, %v860
    %v1069 = vpack.c.b16 %v865, %v861
    %v1070 = vpack.c.b16 %v870, %v866
    %v1071 = vpack.c.b16 %v871, %v867
    %v1072 = vpack.c.b16 %v872, %v868
    %v1073 = vpack.c.b16 %v873, %v869
    %v1074 = vpack.c.b16 %v878, %v874
    %v1075 = vpack.c.b16 %v879, %v875
    %v1076 = vpack.c.b16 %v880, %v876
    %v1077 = vpack.c.b16 %v881, %v877
    %vm1274 = vcmask 130048
    %v1276 = vsel %vm1274, %v75, 0
    %1278 = vmatprep.subr.bf16.mxu0 %v883
    %1279 = vmatpush1.bf16.msra.mxu0 %v882
    %1280 = vmatprep.subr.bf16.mxu0 %v887
    %1281 = vmatpush1.bf16.msra.mxu0 %v886
    %1282 = vmatprep.subr.bf16.mxu0 %v891
    %1283 = vmatpush1.bf16.msra.mxu0 %v890
    %1284 = vmatprep.subr.bf16.mxu0 %v895
    %1285 = vmatpush1.bf16.msra.mxu0 %v894
    %1286 = vmatprep.subr.bf16.mxu0 %v899
    %1287 = vmatpush1.bf16.msra.mxu0 %v898
    %1288 = vmatprep.subr.bf16.mxu0 %v903
    %1289 = vmatpush1.bf16.msra.mxu0 %v902
    %1290 = vmatprep.subr.bf16.mxu0 %v907
    %1291 = vmatpush1.bf16.msra.mxu0 %v906
    %1292 = vmatprep.subr.bf16.mxu0 %v911
    %1293 = vmatpush1.bf16.msra.mxu0 %v910
    %1294 = vmatprep.subr.bf16.mxu0 %v915
    %1295 = vmatpush1.bf16.msra.mxu0 %v914
    %1296 = vmatprep.subr.bf16.mxu0 %v919
    %1297 = vmatpush1.bf16.msra.mxu0 %v918
    %1298 = vmatprep.subr.bf16.mxu0 %v923
    %1299 = vmatpush1.bf16.msra.mxu0 %v922
    %1300 = vmatprep.subr.bf16.mxu0 %v927
    %1301 = vmatpush1.bf16.msra.mxu0 %v926
    %1302 = vmatprep.subr.bf16.mxu0 %v931
    %1303 = vmatpush1.bf16.msra.mxu0 %v930
    %1304 = vmatprep.subr.bf16.mxu0 %v935
    %1305 = vmatpush1.bf16.msra.mxu0 %v934
    %1306 = vmatprep.subr.bf16.mxu0 %v939
    %1307 = vmatpush1.bf16.msra.mxu0 %v938
    %1308 = vmatprep.subr.bf16.mxu0 %v943
    %1309 = vmatpush1.bf16.msra.mxu0 %v942
    %1310 = vmatprep.mubr.bf16.mxu0 %v70
    %1311 = vmatmul.mubr.bf16.gmra.mrb[0].mxu0 %v69
    %v1312 = vpop.f32.mrb[0].mxu0
    %v1313 = vadd.f32 %v277, %v1312
    %v1314 = vpop.f32.mrb[0].mxu0
    %v1315 = vadd.f32 %v281, %v1314
    %v1316 = vpop.f32.mrb[0].mxu0
    %v1317 = vadd.f32 %v277, %v1316
    %v1318 = vpop.f32.mrb[0].mxu0
    %v1319 = vadd.f32 %v281, %v1318
    %1320 = vdwg.mxu0
    %1321 = vmatprep.subr.bf16.mxu0 %v947
    %1322 = vmatpush1.bf16.msra.mxu0 %v946
    %1323 = vmatprep.subr.bf16.mxu0 %v951
    %1324 = vmatpush1.bf16.msra.mxu0 %v950
    %1325 = vmatprep.subr.bf16.mxu0 %v955
    %1326 = vmatpush1.bf16.msra.mxu0 %v954
    %1327 = vmatprep.subr.bf16.mxu0 %v959
    %1328 = vmatpush1.bf16.msra.mxu0 %v958
    %1329 = vmatprep.subr.bf16.mxu0 %v963
    %1330 = vmatpush1.bf16.msra.mxu0 %v962
    %1331 = vmatprep.subr.bf16.mxu0 %v967
    %1332 = vmatpush1.bf16.msra.mxu0 %v966
    %1333 = vmatprep.subr.bf16.mxu0 %v971
    %1334 = vmatpush1.bf16.msra.mxu0 %v970
    %1335 = vmatprep.subr.bf16.mxu0 %v975
    %1336 = vmatpush1.bf16.msra.mxu0 %v974
    %1337 = vmatprep.subr.bf16.mxu0 %v979
    %1338 = vmatpush1.bf16.msra.mxu0 %v978
    %1339 = vmatprep.subr.bf16.mxu0 %v983
    %1340 = vmatpush1.bf16.msra.mxu0 %v982
    %1341 = vmatprep.subr.bf16.mxu0 %v987
    %1342 = vmatpush1.bf16.msra.mxu0 %v986
    %1343 = vmatprep.subr.bf16.mxu0 %v991
    %1344 = vmatpush1.bf16.msra.mxu0 %v990
    %1345 = vmatprep.subr.bf16.mxu0 %v995
    %1346 = vmatpush1.bf16.msra.mxu0 %v994
    %1347 = vmatprep.subr.bf16.mxu0 %v999
    %1348 = vmatpush1.bf16.msra.mxu0 %v998
    %1349 = vmatprep.subr.bf16.mxu0 %v1003
    %1350 = vmatpush1.bf16.msra.mxu0 %v1002
    %1351 = vmatprep.subr.bf16.mxu0 %v1007
    %1352 = vmatpush1.bf16.msra.mxu0 %v1006
    %1353 = vmatprep.mubr.bf16.mxu0 %v72
    %1354 = vmatmul.mubr.bf16.gmra.mrb[0].mxu0 %v71
    %v1355 = vpop.f32.mrb[0].mxu0
    %v1356 = vadd.f32 %v1313, %v1355
    %v1357 = vpop.f32.mrb[0].mxu0
    %v1358 = vadd.f32 %v1315, %v1357
    %v1359 = vpop.f32.mrb[0].mxu0
    %v1360 = vadd.f32 %v1317, %v1359
    %v1361 = vpop.f32.mrb[0].mxu0
    %v1362 = vadd.f32 %v1319, %v1361
    %1363 = vdwg.mxu0
    %1364 = vmatprep.subr.bf16.mxu0 %v1011
    %1365 = vmatpush1.bf16.msra.mxu0 %v1010
    %1366 = vmatprep.subr.bf16.mxu0 %v1015
    %1367 = vmatpush1.bf16.msra.mxu0 %v1014
    %1368 = vmatprep.subr.bf16.mxu0 %v1019
    %1369 = vmatpush1.bf16.msra.mxu0 %v1018
    %1370 = vmatprep.subr.bf16.mxu0 %v1023
    %1371 = vmatpush1.bf16.msra.mxu0 %v1022
    %1372 = vmatprep.subr.bf16.mxu0 %v1027
    %1373 = vmatpush1.bf16.msra.mxu0 %v1026
    %1374 = vmatprep.subr.bf16.mxu0 %v1031
    %1375 = vmatpush1.bf16.msra.mxu0 %v1030
    %1376 = vmatprep.subr.bf16.mxu0 %v1035
    %1377 = vmatpush1.bf16.msra.mxu0 %v1034
    %1378 = vmatprep.subr.bf16.mxu0 %v1039
    %1379 = vmatpush1.bf16.msra.mxu0 %v1038
    %1380 = vmatprep.subr.bf16.mxu0 %v1043
    %1381 = vmatpush1.bf16.msra.mxu0 %v1042
    %1382 = vmatprep.subr.bf16.mxu0 %v1047
    %1383 = vmatpush1.bf16.msra.mxu0 %v1046
    %1384 = vmatprep.subr.bf16.mxu0 %v1051
    %1385 = vmatpush1.bf16.msra.mxu0 %v1050
    %1386 = vmatprep.subr.bf16.mxu0 %v1055
    %1387 = vmatpush1.bf16.msra.mxu0 %v1054
    %1388 = vmatprep.subr.bf16.mxu0 %v1059
    %1389 = vmatpush1.bf16.msra.mxu0 %v1058
    %1390 = vmatprep.subr.bf16.mxu0 %v1063
    %1391 = vmatpush1.bf16.msra.mxu0 %v1062
    %1392 = vmatprep.subr.bf16.mxu0 %v1067
    %1393 = vmatpush1.bf16.msra.mxu0 %v1066
    %1394 = vmatprep.subr.bf16.mxu0 %v1071
    %1395 = vmatpush1.bf16.msra.mxu0 %v1070
    %1396 = vmatprep.mubr.bf16.mxu0 %v74
    %1397 = vmatmul.mubr.bf16.gmra.mrb[0].mxu0 %v73
    %v1398 = vpop.f32.mrb[0].mxu0
    %v1399 = vadd.f32 %v1356, %v1398
    %v1400 = vpop.f32.mrb[0].mxu0
    %v1401 = vadd.f32 %v1358, %v1400
    %v1402 = vpop.f32.mrb[0].mxu0
    %v1403 = vadd.f32 %v1360, %v1402
    %v1404 = vpop.f32.mrb[0].mxu0
    %v1405 = vadd.f32 %v1362, %v1404
    %1406 = vdwg.mxu0
    %1407 = vmatprep.subr.bf16.mxu0 %v1075
    %1408 = vmatpush1.bf16.msra.mxu0 %v1074
    %1409 = vmatprep.subr.bf16.mxu0 0
    %1410 = vmatpush1.bf16.msra.mxu0 0
    %1411 = vmatprep.subr.bf16.mxu0 0
    %1412 = vmatpush1.bf16.msra.mxu0 0
    %1413 = vmatprep.subr.bf16.mxu0 0
    %1414 = vmatpush1.bf16.msra.mxu0 0
    %1415 = vmatprep.subr.bf16.mxu0 0
    %1416 = vmatpush1.bf16.msra.mxu0 0
    %1417 = vmatprep.subr.bf16.mxu0 0
    %1418 = vmatpush1.bf16.msra.mxu0 0
    %1419 = vmatprep.subr.bf16.mxu0 0
    %1420 = vmatpush1.bf16.msra.mxu0 0
    %1421 = vmatprep.subr.bf16.mxu0 0
    %1422 = vmatpush1.bf16.msra.mxu0 0
    %1423 = vmatprep.subr.bf16.mxu0 0
    %1424 = vmatpush1.bf16.msra.mxu0 0
    %1425 = vmatprep.subr.bf16.mxu0 0
    %1426 = vmatpush1.bf16.msra.mxu0 0
    %1427 = vmatprep.subr.bf16.mxu0 0
    %1428 = vmatpush1.bf16.msra.mxu0 0
    %1429 = vmatprep.subr.bf16.mxu0 0
    %1430 = vmatpush1.bf16.msra.mxu0 0
    %1431 = vmatprep.subr.bf16.mxu0 0
    %1432 = vmatpush1.bf16.msra.mxu0 0
    %1433 = vmatprep.subr.bf16.mxu0 0
    %1434 = vmatpush1.bf16.msra.mxu0 0
    %1435 = vmatprep.subr.bf16.mxu0 0
    %1436 = vmatpush1.bf16.msra.mxu0 0
    %1437 = vmatprep.subr.bf16.mxu0 0
    %1438 = vmatpush1.bf16.msra.mxu0 0
    %1439 = vmatprep.mubr.bf16.mxu0 0
    %1440 = vmatmul.mubr.bf16.gmra.mrb[0].mxu0 %v1276
    %v1441 = vpop.f32.mrb[0].mxu0
    %v1442 = vadd.f32 %v1399, %v1441
    %v1443 = vpop.f32.mrb[0].mxu0
    %v1444 = vadd.f32 %v1401, %v1443
    %v1445 = vpop.f32.mrb[0].mxu0
    %v1446 = vadd.f32 %v1403, %v1445
    %v1447 = vpop.f32.mrb[0].mxu0
    %v1448 = vadd.f32 %v1405, %v1447
    %1449 = vdwg.mxu0
    %1450 = vmatprep.subr.bf16.mxu0 %v885
    %1451 = vmatpush1.bf16.msra.mxu0 %v884
    %1452 = vmatprep.subr.bf16.mxu0 %v889
    %1453 = vmatpush1.bf16.msra.mxu0 %v888
    %1454 = vmatprep.subr.bf16.mxu0 %v893
    %1455 = vmatpush1.bf16.msra.mxu0 %v892
    %1456 = vmatprep.subr.bf16.mxu0 %v897
    %1457 = vmatpush1.bf16.msra.mxu0 %v896
    %1458 = vmatprep.subr.bf16.mxu0 %v901
    %1459 = vmatpush1.bf16.msra.mxu0 %v900
    %1460 = vmatprep.subr.bf16.mxu0 %v905
    %1461 = vmatpush1.bf16.msra.mxu0 %v904
    %1462 = vmatprep.subr.bf16.mxu0 %v909
    %1463 = vmatpush1.bf16.msra.mxu0 %v908
    %1464 = vmatprep.subr.bf16.mxu0 %v913
    %1465 = vmatpush1.bf16.msra.mxu0 %v912
    %1466 = vmatprep.subr.bf16.mxu0 %v917
    %1467 = vmatpush1.bf16.msra.mxu0 %v916
    %1468 = vmatprep.subr.bf16.mxu0 %v921
    %1469 = vmatpush1.bf16.msra.mxu0 %v920
    %1470 = vmatprep.subr.bf16.mxu0 %v925
    %1471 = vmatpush1.bf16.msra.mxu0 %v924
    %1472 = vmatprep.subr.bf16.mxu0 %v929
    %1473 = vmatpush1.bf16.msra.mxu0 %v928
    %1474 = vmatprep.subr.bf16.mxu0 %v933
    %1475 = vmatpush1.bf16.msra.mxu0 %v932
    %1476 = vmatprep.subr.bf16.mxu0 %v937
    %1477 = vmatpush1.bf16.msra.mxu0 %v936
    %1478 = vmatprep.subr.bf16.mxu0 %v941
    %1479 = vmatpush1.bf16.msra.mxu0 %v940
    %1480 = vmatprep.subr.bf16.mxu0 %v945
    %1481 = vmatpush1.bf16.msra.mxu0 %v944
    %1482 = vmatprep.mubr.bf16.mxu0 %v70
    %1483 = vmatmul.mubr.bf16.gmra.mrb[0].mxu0 %v69
    %v1484 = vpop.f32.mrb[0].mxu0
    %v1485 = vadd.f32 %v285, %v1484
    %v1486 = vpop.f32.mrb[0].mxu0
    %v1487 = vadd.f32 %v289, %v1486
    %v1488 = vpop.f32.mrb[0].mxu0
    %v1489 = vadd.f32 %v285, %v1488
    %v1490 = vpop.f32.mrb[0].mxu0
    %v1491 = vadd.f32 %v289, %v1490
    %1492 = vdwg.mxu0
    %1493 = vmatprep.subr.bf16.mxu0 %v949
    %1494 = vmatpush1.bf16.msra.mxu0 %v948
    %1495 = vmatprep.subr.bf16.mxu0 %v953
    %1496 = vmatpush1.bf16.msra.mxu0 %v952
    %1497 = vmatprep.subr.bf16.mxu0 %v957
    %1498 = vmatpush1.bf16.msra.mxu0 %v956
    %1499 = vmatprep.subr.bf16.mxu0 %v961
    %1500 = vmatpush1.bf16.msra.mxu0 %v960
    %1501 = vmatprep.subr.bf16.mxu0 %v965
    %1502 = vmatpush1.bf16.msra.mxu0 %v964
    %1503 = vmatprep.subr.bf16.mxu0 %v969
    %1504 = vmatpush1.bf16.msra.mxu0 %v968
    %1505 = vmatprep.subr.bf16.mxu0 %v973
    %1506 = vmatpush1.bf16.msra.mxu0 %v972
    %1507 = vmatprep.subr.bf16.mxu0 %v977
    %1508 = vmatpush1.bf16.msra.mxu0 %v976
    %1509 = vmatprep.subr.bf16.mxu0 %v981
    %1510 = vmatpush1.bf16.msra.mxu0 %v980
    %1511 = vmatprep.subr.bf16.mxu0 %v985
    %1512 = vmatpush1.bf16.msra.mxu0 %v984
    %1513 = vmatprep.subr.bf16.mxu0 %v989
    %1514 = vmatpush1.bf16.msra.mxu0 %v988
    %1515 = vmatprep.subr.bf16.mxu0 %v993
    %1516 = vmatpush1.bf16.msra.mxu0 %v992
    %1517 = vmatprep.subr.bf16.mxu0 %v997
    %1518 = vmatpush1.bf16.msra.mxu0 %v996
    %1519 = vmatprep.subr.bf16.mxu0 %v1001
    %1520 = vmatpush1.bf16.msra.mxu0 %v1000
    %1521 = vmatprep.subr.bf16.mxu0 %v1005
    %1522 = vmatpush1.bf16.msra.mxu0 %v1004
    %1523 = vmatprep.subr.bf16.mxu0 %v1009
    %1524 = vmatpush1.bf16.msra.mxu0 %v1008
    %1525 = vmatprep.mubr.bf16.mxu0 %v72
    %1526 = vmatmul.mubr.bf16.gmra.mrb[0].mxu0 %v71
    %v1527 = vpop.f32.mrb[0].mxu0
    %v1528 = vadd.f32 %v1485, %v1527
    %v1529 = vpop.f32.mrb[0].mxu0
    %v1530 = vadd.f32 %v1487, %v1529
    %v1531 = vpop.f32.mrb[0].mxu0
    %v1532 = vadd.f32 %v1489, %v1531
    %v1533 = vpop.f32.mrb[0].mxu0
    %v1534 = vadd.f32 %v1491, %v1533
    %1535 = vdwg.mxu0
    %1536 = vmatprep.subr.bf16.mxu0 %v1013
    %1537 = vmatpush1.bf16.msra.mxu0 %v1012
    %1538 = vmatprep.subr.bf16.mxu0 %v1017
    %1539 = vmatpush1.bf16.msra.mxu0 %v1016
    %1540 = vmatprep.subr.bf16.mxu0 %v1021
    %1541 = vmatpush1.bf16.msra.mxu0 %v1020
    %1542 = vmatprep.subr.bf16.mxu0 %v1025
    %1543 = vmatpush1.bf16.msra.mxu0 %v1024
    %1544 = vmatprep.subr.bf16.mxu0 %v1029
    %1545 = vmatpush1.bf16.msra.mxu0 %v1028
    %1546 = vmatprep.subr.bf16.mxu0 %v1033
    %1547 = vmatpush1.bf16.msra.mxu0 %v1032
    %1548 = vmatprep.subr.bf16.mxu0 %v1037
    %1549 = vmatpush1.bf16.msra.mxu0 %v1036
    %1550 = vmatprep.subr.bf16.mxu0 %v1041
    %1551 = vmatpush1.bf16.msra.mxu0 %v1040
    %1552 = vmatprep.subr.bf16.mxu0 %v1045
    %1553 = vmatpush1.bf16.msra.mxu0 %v1044
    %1554 = vmatprep.subr.bf16.mxu0 %v1049
    %1555 = vmatpush1.bf16.msra.mxu0 %v1048
    %1556 = vmatprep.subr.bf16.mxu0 %v1053
    %1557 = vmatpush1.bf16.msra.mxu0 %v1052
    %1558 = vmatprep.subr.bf16.mxu0 %v1057
    %1559 = vmatpush1.bf16.msra.mxu0 %v1056
    %1560 = vmatprep.subr.bf16.mxu0 %v1061
    %1561 = vmatpush1.bf16.msra.mxu0 %v1060
    %1562 = vmatprep.subr.bf16.mxu0 %v1065
    %1563 = vmatpush1.bf16.msra.mxu0 %v1064
    %1564 = vmatprep.subr.bf16.mxu0 %v1069
    %1565 = vmatpush1.bf16.msra.mxu0 %v1068
    %1566 = vmatprep.subr.bf16.mxu0 %v1073
    %1567 = vmatpush1.bf16.msra.mxu0 %v1072
    %1568 = vmatprep.mubr.bf16.mxu0 %v74
    %1569 = vmatmul.mubr.bf16.gmra.mrb[0].mxu0 %v73
    %v1570 = vpop.f32.mrb[0].mxu0
    %v1571 = vadd.f32 %v1528, %v1570
    %v1572 = vpop.f32.mrb[0].mxu0
    %v1573 = vadd.f32 %v1530, %v1572
    %v1574 = vpop.f32.mrb[0].mxu0
    %v1575 = vadd.f32 %v1532, %v1574
    %v1576 = vpop.f32.mrb[0].mxu0
    %v1577 = vadd.f32 %v1534, %v1576
    %1578 = vdwg.mxu0
    %1579 = vmatprep.subr.bf16.mxu0 %v1077
    %1580 = vmatpush1.bf16.msra.mxu0 %v1076
    %1581 = vmatprep.subr.bf16.mxu0 0
    %1582 = vmatpush1.bf16.msra.mxu0 0
    %1583 = vmatprep.subr.bf16.mxu0 0
    %1584 = vmatpush1.bf16.msra.mxu0 0
    %1585 = vmatprep.subr.bf16.mxu0 0
    %1586 = vmatpush1.bf16.msra.mxu0 0
    %1587 = vmatprep.subr.bf16.mxu0 0
    %1588 = vmatpush1.bf16.msra.mxu0 0
    %1589 = vmatprep.subr.bf16.mxu0 0
    %1590 = vmatpush1.bf16.msra.mxu0 0
    %1591 = vmatprep.subr.bf16.mxu0 0
    %1592 = vmatpush1.bf16.msra.mxu0 0
    %1593 = vmatprep.subr.bf16.mxu0 0
    %1594 = vmatpush1.bf16.msra.mxu0 0
    %1595 = vmatprep.subr.bf16.mxu0 0
    %1596 = vmatpush1.bf16.msra.mxu0 0
    %1597 = vmatprep.subr.bf16.mxu0 0
    %1598 = vmatpush1.bf16.msra.mxu0 0
    %1599 = vmatprep.subr.bf16.mxu0 0
    %1600 = vmatpush1.bf16.msra.mxu0 0
    %1601 = vmatprep.subr.bf16.mxu0 0
    %1602 = vmatpush1.bf16.msra.mxu0 0
    %1603 = vmatprep.subr.bf16.mxu0 0
    %1604 = vmatpush1.bf16.msra.mxu0 0
    %1605 = vmatprep.subr.bf16.mxu0 0
    %1606 = vmatpush1.bf16.msra.mxu0 0
    %1607 = vmatprep.subr.bf16.mxu0 0
    %1608 = vmatpush1.bf16.msra.mxu0 0
    %1609 = vmatprep.subr.bf16.mxu0 0
    %1610 = vmatpush1.bf16.msra.mxu0 0
    %1611 = vmatprep.mubr.bf16.mxu0 0
    %1612 = vmatmul.mubr.bf16.gmra.mrb[0].mxu0 %v1276
    %v1613 = vpop.f32.mrb[0].mxu0
    %v1614 = vadd.f32 %v1571, %v1613
    %v1615 = vpop.f32.mrb[0].mxu0
    %v1616 = vadd.f32 %v1573, %v1615
    %v1617 = vpop.f32.mrb[0].mxu0
    %v1618 = vadd.f32 %v1575, %v1617
    %v1619 = vpop.f32.mrb[0].mxu0
    %v1620 = vadd.f32 %v1577, %v1619
    %1621 = vdwg.mxu0
    %v1622 = vmax.f32 %v1442, 0.0
    %v1623 = vmax.f32 %v1444, 0.0
    %v1624 = vmax.f32 %v1614, 0.0
    %v1625 = vmax.f32 %v1616, 0.0
    %v1626 = vmax.f32 %v1446, 0.0
    %v1627 = vmax.f32 %v1448, 0.0
    %v1628 = vmax.f32 %v1618, 0.0
    %v1629 = vmax.f32 %v1620, 0.0
    %v1630 = vpack.c.bf16 %v1626, %v1622
    %v1631 = vpack.c.bf16 %v1627, %v1623
    %v1632 = vpack.c.bf16 %v1628, %v1624
    %v1633 = vpack.c.bf16 %v1629, %v1625
    %v1634 = vld [vmem:[#allocation4] sm:$0xff]
    %v1635 = vld [vmem:[#allocation4 + $0x8] sm:$0xff]
    %v1636 = vld [vmem:[#allocation4 + $0x10] sm:$0xff]
    %v1637 = vld [vmem:[#allocation4 + $0x18] sm:$0xff]
    %v1638 = vld [vmem:[#allocation4 + $0x20] sm:$0xff]
    %v1639 = vld [vmem:[#allocation4 + $0x28] sm:$0xff]
    %v1640 = vld [vmem:[#allocation4 + $0x30] sm:$0xff]
    %v1641 = vld [vmem:[#allocation4 + $0x38] sm:$0xff]
    %v1642 = vld [vmem:[#allocation4 + $0x40] sm:$0xff]
    %v1643 = vld [vmem:[#allocation4 + $0x48] sm:$0xff]
    %v1644 = vld [vmem:[#allocation4 + $0x50] sm:$0xff]
    %v1645 = vld [vmem:[#allocation4 + $0x58] sm:$0xff]
    %v1646 = vld [vmem:[#allocation4 + $0x60] sm:$0xff]
    %v1647 = vld [vmem:[#allocation4 + $0x68] sm:$0xff]
    %v1648 = vld [vmem:[#allocation4 + $0x70] sm:$0xff]
    %v1649 = vld [vmem:[#allocation4 + $0x78] sm:$0xff]
    %v1650 = vld [vmem:[#allocation4 + $0x80] sm:$0xff]
    %v1651 = vld [vmem:[#allocation4 + $0x88] sm:$0xff]
    %v1652 = vld [vmem:[#allocation4 + $0x90] sm:$0xff]
    %v1653 = vld [vmem:[#allocation4 + $0x98] sm:$0xff]
    %v1654 = vld [vmem:[#allocation4 + $0xa0] sm:$0xff]
    %v1655 = vld [vmem:[#allocation4 + $0xa8] sm:$0xff]
    %v1656 = vld [vmem:[#allocation4 + $0xb0] sm:$0xff]
    %v1657 = vld [vmem:[#allocation4 + $0xb8] sm:$0xff]
    %v1658 = vld [vmem:[#allocation4 + $0xc0] sm:$0xff]
    %v1659 = vld [vmem:[#allocation4 + $0xc8] sm:$0xff]
    %v1660 = vld [vmem:[#allocation4 + $0xd0] sm:$0xff]
    %v1661 = vld [vmem:[#allocation4 + $0xd8] sm:$0xff]
    %v1662 = vld [vmem:[#allocation4 + $0xe0] sm:$0xff]
    %v1663 = vld [vmem:[#allocation4 + $0xe8] sm:$0xff]
    %v1664 = vld [vmem:[#allocation4 + $0xf0] sm:$0xff]
    %v1665 = vld [vmem:[#allocation4 + $0xf8] sm:$0xff]
    %v1666 = vld [vmem:[#allocation4 + $0x100] sm:$0xff]
    %v1667 = vld [vmem:[#allocation4 + $0x108] sm:$0xff]
    %v1668 = vld [vmem:[#allocation4 + $0x110] sm:$0xff]
    %v1669 = vld [vmem:[#allocation4 + $0x118] sm:$0xff]
    %v1670 = vld [vmem:[#allocation4 + $0x120] sm:$0xff]
    %v1671 = vld [vmem:[#allocation4 + $0x128] sm:$0xff]
    %v1672 = vld [vmem:[#allocation4 + $0x130] sm:$0xff]
    %v1673 = vld [vmem:[#allocation4 + $0x138] sm:$0xff]
    %v1674 = vld [vmem:[#allocation4 + $0x140] sm:$0xff]
    %v1675 = vld [vmem:[#allocation4 + $0x148] sm:$0xff]
    %v1676 = vld [vmem:[#allocation4 + $0x150] sm:$0xff]
    %v1677 = vld [vmem:[#allocation4 + $0x158] sm:$0xff]
    %v1678 = vld [vmem:[#allocation4 + $0x160] sm:$0xff]
    %v1679 = vld [vmem:[#allocation4 + $0x168] sm:$0xff]
    %v1680 = vld [vmem:[#allocation4 + $0x170] sm:$0xff]
    %v1681 = vld [vmem:[#allocation4 + $0x178] sm:$0xff]
    %v1682 = vld [vmem:[#allocation4 + $0x180] sm:$0xff]
    %v1683 = vld [vmem:[#allocation4 + $0x188] sm:$0xff]
    %v1684 = vld [vmem:[#allocation4 + $0x190] sm:$0xff]
    %v1685 = vld [vmem:[#allocation4 + $0x198] sm:$0xff]
    %v1686 = vld [vmem:[#allocation4 + $0x1a0] sm:$0xff]
    %v1687 = vld [vmem:[#allocation4 + $0x1a8] sm:$0xff]
    %v1688 = vld [vmem:[#allocation4 + $0x1b0] sm:$0xff]
    %v1689 = vld [vmem:[#allocation4 + $0x1b8] sm:$0xff]
    %v1690 = vld [vmem:[#allocation4 + $0x1c0] sm:$0xff]
    %v1691 = vld [vmem:[#allocation4 + $0x1c8] sm:$0xff]
    %v1692 = vld [vmem:[#allocation4 + $0x1d0] sm:$0xff]
    %v1693 = vld [vmem:[#allocation4 + $0x1d8] sm:$0xff]
    %v1694 = vld [vmem:[#allocation4 + $0x1e0] sm:$0xff]
    %v1695 = vld [vmem:[#allocation4 + $0x1e8] sm:$0xff]
    %v1696 = vld [vmem:[#allocation4 + $0x1f0] sm:$0xff]
    %v1697 = vld [vmem:[#allocation4 + $0x1f8] sm:$0xff]
    %v1698 = vld [vmem:[#allocation4 + $0x200] sm:$0xff]
    %v1699 = vld [vmem:[#allocation4 + $0x208] sm:$0xff]
    %v1700 = vld [vmem:[#allocation4 + $0x210] sm:$0xff]
    %v1701 = vld [vmem:[#allocation4 + $0x218] sm:$0xff]
    %v1702 = vld [vmem:[#allocation4 + $0x220] sm:$0xff]
    %v1703 = vld [vmem:[#allocation4 + $0x228] sm:$0xff]
    %v1704 = vld [vmem:[#allocation4 + $0x230] sm:$0xff]
    %v1705 = vld [vmem:[#allocation4 + $0x238] sm:$0xff]
    %v1706 = vld [vmem:[#allocation4 + $0x240] sm:$0xff]
    %v1707 = vld [vmem:[#allocation4 + $0x248] sm:$0xff]
    %v1708 = vld [vmem:[#allocation4 + $0x250] sm:$0xff]
    %v1709 = vld [vmem:[#allocation4 + $0x258] sm:$0xff]
    %v1710 = vld [vmem:[#allocation4 + $0x260] sm:$0xff]
    %v1711 = vld [vmem:[#allocation4 + $0x268] sm:$0xff]
    %v1712 = vld [vmem:[#allocation4 + $0x270] sm:$0xff]
    %v1713 = vld [vmem:[#allocation4 + $0x278] sm:$0xff]
    %v1714 = vld [vmem:[#allocation4 + $0x280] sm:$0xff]
    %v1715 = vld [vmem:[#allocation4 + $0x288] sm:$0xff]
    %v1716 = vld [vmem:[#allocation4 + $0x290] sm:$0xff]
    %v1717 = vld [vmem:[#allocation4 + $0x298] sm:$0xff]
    %v1718 = vld [vmem:[#allocation4 + $0x2a0] sm:$0xff]
    %v1719 = vld [vmem:[#allocation4 + $0x2a8] sm:$0xff]
    %v1720 = vld [vmem:[#allocation4 + $0x2b0] sm:$0xff]
    %v1721 = vld [vmem:[#allocation4 + $0x2b8] sm:$0xff]
    %v1722 = vld [vmem:[#allocation4 + $0x2c0] sm:$0xff]
    %v1723 = vld [vmem:[#allocation4 + $0x2c8] sm:$0xff]
    %v1724 = vld [vmem:[#allocation4 + $0x2d0] sm:$0xff]
    %v1725 = vld [vmem:[#allocation4 + $0x2d8] sm:$0xff]
    %v1726 = vld [vmem:[#allocation4 + $0x2e0] sm:$0xff]
    %v1727 = vld [vmem:[#allocation4 + $0x2e8] sm:$0xff]
    %v1728 = vld [vmem:[#allocation4 + $0x2f0] sm:$0xff]
    %v1729 = vld [vmem:[#allocation4 + $0x2f8] sm:$0xff]
    %v1730 = vld [vmem:[#allocation4 + $0x300] sm:$0xff]
    %v1731 = vld [vmem:[#allocation4 + $0x308] sm:$0xff]
    %v1732 = vld [vmem:[#allocation4 + $0x310] sm:$0xff]
    %v1733 = vld [vmem:[#allocation4 + $0x318] sm:$0xff]
    %v1734 = vld [vmem:[#allocation4 + $0x320] sm:$0xff]
    %v1735 = vld [vmem:[#allocation4 + $0x328] sm:$0xff]
    %v1736 = vld [vmem:[#allocation4 + $0x330] sm:$0xff]
    %v1737 = vld [vmem:[#allocation4 + $0x338] sm:$0xff]
    %v1738 = vld [vmem:[#allocation4 + $0x340] sm:$0xff]
    %v1739 = vld [vmem:[#allocation4 + $0x348] sm:$0xff]
    %v1740 = vld [vmem:[#allocation4 + $0x350] sm:$0xff]
    %v1741 = vld [vmem:[#allocation4 + $0x358] sm:$0xff]
    %v1742 = vld [vmem:[#allocation4 + $0x360] sm:$0xff]
    %v1743 = vld [vmem:[#allocation4 + $0x368] sm:$0xff]
    %v1744 = vld [vmem:[#allocation4 + $0x370] sm:$0xff]
    %v1745 = vld [vmem:[#allocation4 + $0x378] sm:$0xff]
    %v1746 = vld [vmem:[#allocation4 + $0x380] sm:$0xff]
    %v1747 = vld [vmem:[#allocation4 + $0x388] sm:$0xff]
    %v1748 = vld [vmem:[#allocation4 + $0x390] sm:$0xff]
    %v1749 = vld [vmem:[#allocation4 + $0x398] sm:$0xff]
    %v1750 = vld [vmem:[#allocation4 + $0x3a0] sm:$0xff]
    %v1751 = vld [vmem:[#allocation4 + $0x3a8] sm:$0xff]
    %v1752 = vld [vmem:[#allocation4 + $0x3b0] sm:$0xff]
    %v1753 = vld [vmem:[#allocation4 + $0x3b8] sm:$0xff]
    %v1754 = vld [vmem:[#allocation4 + $0x3c0] sm:$0xff]
    %v1755 = vld [vmem:[#allocation4 + $0x3c8] sm:$0xff]
    %v1756 = vld [vmem:[#allocation4 + $0x3d0] sm:$0xff]
    %v1757 = vld [vmem:[#allocation4 + $0x3d8] sm:$0xff]
    %v1758 = vld [vmem:[#allocation4 + $0x3e0] sm:$0xff]
    %v1759 = vld [vmem:[#allocation4 + $0x3e8] sm:$0xff]
    %v1760 = vld [vmem:[#allocation4 + $0x3f0] sm:$0xff]
    %v1761 = vld [vmem:[#allocation4 + $0x3f8] sm:$0xff]
    %v1762 = vld [vmem:[%s4] sm:$0xf]
    %v1764 = vlaneseq
    %v1765 = vshrl.u32 %v1764, 7
    %v1766 = vsub.s32 0, %v1765
    %v1767 = vrot.slane %v1762, %v1766
    %v1768 = vlaneseq
    %v1769 = vshrl.u32 %v1768, 7
    %v1770 = vsub.s32 1, %v1769
    %v1771 = vrot.slane %v1762, %v1770
    %v1772 = vlaneseq
    %v1773 = vshrl.u32 %v1772, 7
    %v1774 = vsub.s32 2, %v1773
    %v1775 = vrot.slane %v1762, %v1774
    %v1776 = vlaneseq
    %v1777 = vshrl.u32 %v1776, 7
    %v1778 = vsub.s32 3, %v1777
    %v1779 = vrot.slane %v1762, %v1778
    %v1912 = vunpack.c.l.b16 %v1634
    %v1913 = vunpack.c.h.b16 %v1634
    %v1914 = vunpack.c.l.b16 %v1635
    %v1915 = vunpack.c.h.b16 %v1635
    %v1916 = vunpack.c.l.b16 %v1636
    %v1917 = vunpack.c.h.b16 %v1636
    %v1918 = vunpack.c.l.b16 %v1637
    %v1919 = vunpack.c.h.b16 %v1637
    %v1920 = vunpack.c.l.b16 %v1638
    %v1921 = vunpack.c.h.b16 %v1638
    %v1922 = vunpack.c.l.b16 %v1639
    %v1923 = vunpack.c.h.b16 %v1639
    %v1924 = vunpack.c.l.b16 %v1640
    %v1925 = vunpack.c.h.b16 %v1640
    %v1926 = vunpack.c.l.b16 %v1641
    %v1927 = vunpack.c.h.b16 %v1641
    %v1928 = vunpack.c.l.b16 %v1642
    %v1929 = vunpack.c.h.b16 %v1642
    %v1930 = vunpack.c.l.b16 %v1643
    %v1931 = vunpack.c.h.b16 %v1643
    %v1932 = vunpack.c.l.b16 %v1644
    %v1933 = vunpack.c.h.b16 %v1644
    %v1934 = vunpack.c.l.b16 %v1645
    %v1935 = vunpack.c.h.b16 %v1645
    %v1936 = vunpack.c.l.b16 %v1646
    %v1937 = vunpack.c.h.b16 %v1646
    %v1938 = vunpack.c.l.b16 %v1647
    %v1939 = vunpack.c.h.b16 %v1647
    %v1940 = vunpack.c.l.b16 %v1648
    %v1941 = vunpack.c.h.b16 %v1648
    %v1942 = vunpack.c.l.b16 %v1649
    %v1943 = vunpack.c.h.b16 %v1649
    %v1944 = vunpack.c.l.b16 %v1650
    %v1945 = vunpack.c.h.b16 %v1650
    %v1946 = vunpack.c.l.b16 %v1651
    %v1947 = vunpack.c.h.b16 %v1651
    %v1948 = vunpack.c.l.b16 %v1652
    %v1949 = vunpack.c.h.b16 %v1652
    %v1950 = vunpack.c.l.b16 %v1653
    %v1951 = vunpack.c.h.b16 %v1653
    %v1952 = vunpack.c.l.b16 %v1654
    %v1953 = vunpack.c.h.b16 %v1654
    %v1954 = vunpack.c.l.b16 %v1655
    %v1955 = vunpack.c.h.b16 %v1655
    %v1956 = vunpack.c.l.b16 %v1656
    %v1957 = vunpack.c.h.b16 %v1656
    %v1958 = vunpack.c.l.b16 %v1657
    %v1959 = vunpack.c.h.b16 %v1657
    %v1960 = vunpack.c.l.b16 %v1658
    %v1961 = vunpack.c.h.b16 %v1658
    %v1962 = vunpack.c.l.b16 %v1659
    %v1963 = vunpack.c.h.b16 %v1659
    %v1964 = vunpack.c.l.b16 %v1660
    %v1965 = vunpack.c.h.b16 %v1660
    %v1966 = vunpack.c.l.b16 %v1661
    %v1967 = vunpack.c.h.b16 %v1661
    %v1968 = vunpack.c.l.b16 %v1662
    %v1969 = vunpack.c.h.b16 %v1662
    %v1970 = vunpack.c.l.b16 %v1663
    %v1971 = vunpack.c.h.b16 %v1663
    %v1972 = vunpack.c.l.b16 %v1664
    %v1973 = vunpack.c.h.b16 %v1664
    %v1974 = vunpack.c.l.b16 %v1665
    %v1975 = vunpack.c.h.b16 %v1665
    %v1976 = vunpack.c.l.b16 %v1666
    %v1977 = vunpack.c.h.b16 %v1666
    %v1978 = vunpack.c.l.b16 %v1667
    %v1979 = vunpack.c.h.b16 %v1667
    %v1980 = vunpack.c.l.b16 %v1668
    %v1981 = vunpack.c.h.b16 %v1668
    %v1982 = vunpack.c.l.b16 %v1669
    %v1983 = vunpack.c.h.b16 %v1669
    %v1984 = vunpack.c.l.b16 %v1670
    %v1985 = vunpack.c.h.b16 %v1670
    %v1986 = vunpack.c.l.b16 %v1671
    %v1987 = vunpack.c.h.b16 %v1671
    %v1988 = vunpack.c.l.b16 %v1672
    %v1989 = vunpack.c.h.b16 %v1672
    %v1990 = vunpack.c.l.b16 %v1673
    %v1991 = vunpack.c.h.b16 %v1673
    %v1992 = vunpack.c.l.b16 %v1674
    %v1993 = vunpack.c.h.b16 %v1674
    %v1994 = vunpack.c.l.b16 %v1675
    %v1995 = vunpack.c.h.b16 %v1675
    %v1996 = vunpack.c.l.b16 %v1676
    %v1997 = vunpack.c.h.b16 %v1676
    %v1998 = vunpack.c.l.b16 %v1677
    %v1999 = vunpack.c.h.b16 %v1677
    %v2000 = vunpack.c.l.b16 %v1678
    %v2001 = vunpack.c.h.b16 %v1678
    %v2002 = vunpack.c.l.b16 %v1679
    %v2003 = vunpack.c.h.b16 %v1679
    %v2004 = vunpack.c.l.b16 %v1680
    %v2005 = vunpack.c.h.b16 %v1680
    %v2006 = vunpack.c.l.b16 %v1681
    %v2007 = vunpack.c.h.b16 %v1681
    %v2008 = vunpack.c.l.b16 %v1682
    %v2009 = vunpack.c.h.b16 %v1682
    %v2010 = vunpack.c.l.b16 %v1683
    %v2011 = vunpack.c.h.b16 %v1683
    %v2012 = vunpack.c.l.b16 %v1684
    %v2013 = vunpack.c.h.b16 %v1684
    %v2014 = vunpack.c.l.b16 %v1685
    %v2015 = vunpack.c.h.b16 %v1685
    %v2016 = vunpack.c.l.b16 %v1686
    %v2017 = vunpack.c.h.b16 %v1686
    %v2018 = vunpack.c.l.b16 %v1687
    %v2019 = vunpack.c.h.b16 %v1687
    %v2020 = vunpack.c.l.b16 %v1688
    %v2021 = vunpack.c.h.b16 %v1688
    %v2022 = vunpack.c.l.b16 %v1689
    %v2023 = vunpack.c.h.b16 %v1689
    %v2024 = vunpack.c.l.b16 %v1690
    %v2025 = vunpack.c.h.b16 %v1690
    %v2026 = vunpack.c.l.b16 %v1691
    %v2027 = vunpack.c.h.b16 %v1691
    %v2028 = vunpack.c.l.b16 %v1692
    %v2029 = vunpack.c.h.b16 %v1692
    %v2030 = vunpack.c.l.b16 %v1693
    %v2031 = vunpack.c.h.b16 %v1693
    %v2032 = vunpack.c.l.b16 %v1694
    %v2033 = vunpack.c.h.b16 %v1694
    %v2034 = vunpack.c.l.b16 %v1695
    %v2035 = vunpack.c.h.b16 %v1695
    %v2036 = vunpack.c.l.b16 %v1696
    %v2037 = vunpack.c.h.b16 %v1696
    %v2038 = vunpack.c.l.b16 %v1697
    %v2039 = vunpack.c.h.b16 %v1697
    %v2040 = vunpack.c.l.b16 %v1698
    %v2041 = vunpack.c.h.b16 %v1698
    %v2042 = vunpack.c.l.b16 %v1699
    %v2043 = vunpack.c.h.b16 %v1699
    %v2044 = vunpack.c.l.b16 %v1700
    %v2045 = vunpack.c.h.b16 %v1700
    %v2046 = vunpack.c.l.b16 %v1701
    %v2047 = vunpack.c.h.b16 %v1701
    %v2048 = vunpack.c.l.b16 %v1702
    %v2049 = vunpack.c.h.b16 %v1702
    %v2050 = vunpack.c.l.b16 %v1703
    %v2051 = vunpack.c.h.b16 %v1703
    %v2052 = vunpack.c.l.b16 %v1704
    %v2053 = vunpack.c.h.b16 %v1704
    %v2054 = vunpack.c.l.b16 %v1705
    %v2055 = vunpack.c.h.b16 %v1705
    %v2056 = vunpack.c.l.b16 %v1706
    %v2057 = vunpack.c.h.b16 %v1706
    %v2058 = vunpack.c.l.b16 %v1707
    %v2059 = vunpack.c.h.b16 %v1707
    %v2060 = vunpack.c.l.b16 %v1708
    %v2061 = vunpack.c.h.b16 %v1708
    %v2062 = vunpack.c.l.b16 %v1709
    %v2063 = vunpack.c.h.b16 %v1709
    %v2064 = vunpack.c.l.b16 %v1710
    %v2065 = vunpack.c.h.b16 %v1710
    %v2066 = vunpack.c.l.b16 %v1711
    %v2067 = vunpack.c.h.b16 %v1711
    %v2068 = vunpack.c.l.b16 %v1712
    %v2069 = vunpack.c.h.b16 %v1712
    %v2070 = vunpack.c.l.b16 %v1713
    %v2071 = vunpack.c.h.b16 %v1713
    %v2072 = vunpack.c.l.b16 %v1714
    %v2073 = vunpack.c.h.b16 %v1714
    %v2074 = vunpack.c.l.b16 %v1715
    %v2075 = vunpack.c.h.b16 %v1715
    %v2076 = vunpack.c.l.b16 %v1716
    %v2077 = vunpack.c.h.b16 %v1716
    %v2078 = vunpack.c.l.b16 %v1717
    %v2079 = vunpack.c.h.b16 %v1717
    %v2080 = vunpack.c.l.b16 %v1718
    %v2081 = vunpack.c.h.b16 %v1718
    %v2082 = vunpack.c.l.b16 %v1719
    %v2083 = vunpack.c.h.b16 %v1719
    %v2084 = vunpack.c.l.b16 %v1720
    %v2085 = vunpack.c.h.b16 %v1720
    %v2086 = vunpack.c.l.b16 %v1721
    %v2087 = vunpack.c.h.b16 %v1721
    %v2088 = vunpack.c.l.b16 %v1722
    %v2089 = vunpack.c.h.b16 %v1722
    %v2090 = vunpack.c.l.b16 %v1723
    %v2091 = vunpack.c.h.b16 %v1723
    %v2092 = vunpack.c.l.b16 %v1724
    %v2093 = vunpack.c.h.b16 %v1724
    %v2094 = vunpack.c.l.b16 %v1725
    %v2095 = vunpack.c.h.b16 %v1725
    %v2096 = vunpack.c.l.b16 %v1726
    %v2097 = vunpack.c.h.b16 %v1726
    %v2098 = vunpack.c.l.b16 %v1727
    %v2099 = vunpack.c.h.b16 %v1727
    %v2100 = vunpack.c.l.b16 %v1728
    %v2101 = vunpack.c.h.b16 %v1728
    %v2102 = vunpack.c.l.b16 %v1729
    %v2103 = vunpack.c.h.b16 %v1729
    %v2104 = vunpack.c.l.b16 %v1730
    %v2105 = vunpack.c.h.b16 %v1730
    %v2106 = vunpack.c.l.b16 %v1731
    %v2107 = vunpack.c.h.b16 %v1731
    %v2108 = vunpack.c.l.b16 %v1732
    %v2109 = vunpack.c.h.b16 %v1732
    %v2110 = vunpack.c.l.b16 %v1733
    %v2111 = vunpack.c.h.b16 %v1733
    %v2112 = vunpack.c.l.b16 %v1734
    %v2113 = vunpack.c.h.b16 %v1734
    %v2114 = vunpack.c.l.b16 %v1735
    %v2115 = vunpack.c.h.b16 %v1735
    %v2116 = vunpack.c.l.b16 %v1736
    %v2117 = vunpack.c.h.b16 %v1736
    %v2118 = vunpack.c.l.b16 %v1737
    %v2119 = vunpack.c.h.b16 %v1737
    %v2120 = vunpack.c.l.b16 %v1738
    %v2121 = vunpack.c.h.b16 %v1738
    %v2122 = vunpack.c.l.b16 %v1739
    %v2123 = vunpack.c.h.b16 %v1739
    %v2124 = vunpack.c.l.b16 %v1740
    %v2125 = vunpack.c.h.b16 %v1740
    %v2126 = vunpack.c.l.b16 %v1741
    %v2127 = vunpack.c.h.b16 %v1741
    %v2128 = vunpack.c.l.b16 %v1742
    %v2129 = vunpack.c.h.b16 %v1742
    %v2130 = vunpack.c.l.b16 %v1743
    %v2131 = vunpack.c.h.b16 %v1743
    %v2132 = vunpack.c.l.b16 %v1744
    %v2133 = vunpack.c.h.b16 %v1744
    %v2134 = vunpack.c.l.b16 %v1745
    %v2135 = vunpack.c.h.b16 %v1745
    %v2136 = vunpack.c.l.b16 %v1746
    %v2137 = vunpack.c.h.b16 %v1746
    %v2138 = vunpack.c.l.b16 %v1747
    %v2139 = vunpack.c.h.b16 %v1747
    %v2140 = vunpack.c.l.b16 %v1748
    %v2141 = vunpack.c.h.b16 %v1748
    %v2142 = vunpack.c.l.b16 %v1749
    %v2143 = vunpack.c.h.b16 %v1749
    %v2144 = vunpack.c.l.b16 %v1750
    %v2145 = vunpack.c.h.b16 %v1750
    %v2146 = vunpack.c.l.b16 %v1751
    %v2147 = vunpack.c.h.b16 %v1751
    %v2148 = vunpack.c.l.b16 %v1752
    %v2149 = vunpack.c.h.b16 %v1752
    %v2150 = vunpack.c.l.b16 %v1753
    %v2151 = vunpack.c.h.b16 %v1753
    %v2152 = vunpack.c.l.b16 %v1754
    %v2153 = vunpack.c.h.b16 %v1754
    %v2154 = vunpack.c.l.b16 %v1755
    %v2155 = vunpack.c.h.b16 %v1755
    %v2156 = vunpack.c.l.b16 %v1756
    %v2157 = vunpack.c.h.b16 %v1756
    %v2158 = vunpack.c.l.b16 %v1757
    %v2159 = vunpack.c.h.b16 %v1757
    %v2160 = vunpack.c.l.b16 %v1758
    %v2161 = vunpack.c.h.b16 %v1758
    %v2162 = vunpack.c.l.b16 %v1759
    %v2163 = vunpack.c.h.b16 %v1759
    %v2164 = vunpack.c.l.b16 %v1760
    %v2165 = vunpack.c.h.b16 %v1760
    %v2166 = vunpack.c.l.b16 %v1761
    %v2167 = vunpack.c.h.b16 %v1761
    %v2168 = vpack.c.b16 %v1916, %v1912
    %v2169 = vpack.c.b16 %v1917, %v1913
    %v2170 = vpack.c.b16 %v1918, %v1914
    %v2171 = vpack.c.b16 %v1919, %v1915
    %v2172 = vpack.c.b16 %v1924, %v1920
    %v2173 = vpack.c.b16 %v1925, %v1921
    %v2174 = vpack.c.b16 %v1926, %v1922
    %v2175 = vpack.c.b16 %v1927, %v1923
    %v2176 = vpack.c.b16 %v1932, %v1928
    %v2177 = vpack.c.b16 %v1933, %v1929
    %v2178 = vpack.c.b16 %v1934, %v1930
    %v2179 = vpack.c.b16 %v1935, %v1931
    %v2180 = vpack.c.b16 %v1940, %v1936
    %v2181 = vpack.c.b16 %v1941, %v1937
    %v2182 = vpack.c.b16 %v1942, %v1938
    %v2183 = vpack.c.b16 %v1943, %v1939
    %v2184 = vpack.c.b16 %v1948, %v1944
    %v2185 = vpack.c.b16 %v1949, %v1945
    %v2186 = vpack.c.b16 %v1950, %v1946
    %v2187 = vpack.c.b16 %v1951, %v1947
    %v2188 = vpack.c.b16 %v1956, %v1952
    %v2189 = vpack.c.b16 %v1957, %v1953
    %v2190 = vpack.c.b16 %v1958, %v1954
    %v2191 = vpack.c.b16 %v1959, %v1955
    %v2192 = vpack.c.b16 %v1964, %v1960
    %v2193 = vpack.c.b16 %v1965, %v1961
    %v2194 = vpack.c.b16 %v1966, %v1962
    %v2195 = vpack.c.b16 %v1967, %v1963
    %v2196 = vpack.c.b16 %v1972, %v1968
    %v2197 = vpack.c.b16 %v1973, %v1969
    %v2198 = vpack.c.b16 %v1974, %v1970
    %v2199 = vpack.c.b16 %v1975, %v1971
    %v2200 = vpack.c.b16 %v1980, %v1976
    %v2201 = vpack.c.b16 %v1981, %v1977
    %v2202 = vpack.c.b16 %v1982, %v1978
    %v2203 = vpack.c.b16 %v1983, %v1979
    %v2204 = vpack.c.b16 %v1988, %v1984
    %v2205 = vpack.c.b16 %v1989, %v1985
    %v2206 = vpack.c.b16 %v1990, %v1986
    %v2207 = vpack.c.b16 %v1991, %v1987
    %v2208 = vpack.c.b16 %v1996, %v1992
    %v2209 = vpack.c.b16 %v1997, %v1993
    %v2210 = vpack.c.b16 %v1998, %v1994
    %v2211 = vpack.c.b16 %v1999, %v1995
    %v2212 = vpack.c.b16 %v2004, %v2000
    %v2213 = vpack.c.b16 %v2005, %v2001
    %v2214 = vpack.c.b16 %v2006, %v2002
    %v2215 = vpack.c.b16 %v2007, %v2003
    %v2216 = vpack.c.b16 %v2012, %v2008
    %v2217 = vpack.c.b16 %v2013, %v2009
    %v2218 = vpack.c.b16 %v2014, %v2010
    %v2219 = vpack.c.b16 %v2015, %v2011
    %v2220 = vpack.c.b16 %v2020, %v2016
    %v2221 = vpack.c.b16 %v2021, %v2017
    %v2222 = vpack.c.b16 %v2022, %v2018
    %v2223 = vpack.c.b16 %v2023, %v2019
    %v2224 = vpack.c.b16 %v2028, %v2024
    %v2225 = vpack.c.b16 %v2029, %v2025
    %v2226 = vpack.c.b16 %v2030, %v2026
    %v2227 = vpack.c.b16 %v2031, %v2027
    %v2228 = vpack.c.b16 %v2036, %v2032
    %v2229 = vpack.c.b16 %v2037, %v2033
    %v2230 = vpack.c.b16 %v2038, %v2034
    %v2231 = vpack.c.b16 %v2039, %v2035
    %v2232 = vpack.c.b16 %v2044, %v2040
    %v2233 = vpack.c.b16 %v2045, %v2041
    %v2234 = vpack.c.b16 %v2046, %v2042
    %v2235 = vpack.c.b16 %v2047, %v2043
    %v2236 = vpack.c.b16 %v2052, %v2048
    %v2237 = vpack.c.b16 %v2053, %v2049
    %v2238 = vpack.c.b16 %v2054, %v2050
    %v2239 = vpack.c.b16 %v2055, %v2051
    %v2240 = vpack.c.b16 %v2060, %v2056
    %v2241 = vpack.c.b16 %v2061, %v2057
    %v2242 = vpack.c.b16 %v2062, %v2058
    %v2243 = vpack.c.b16 %v2063, %v2059
    %v2244 = vpack.c.b16 %v2068, %v2064
    %v2245 = vpack.c.b16 %v2069, %v2065
    %v2246 = vpack.c.b16 %v2070, %v2066
    %v2247 = vpack.c.b16 %v2071, %v2067
    %v2248 = vpack.c.b16 %v2076, %v2072
    %v2249 = vpack.c.b16 %v2077, %v2073
    %v2250 = vpack.c.b16 %v2078, %v2074
    %v2251 = vpack.c.b16 %v2079, %v2075
    %v2252 = vpack.c.b16 %v2084, %v2080
    %v2253 = vpack.c.b16 %v2085, %v2081
    %v2254 = vpack.c.b16 %v2086, %v2082
    %v2255 = vpack.c.b16 %v2087, %v2083
    %v2256 = vpack.c.b16 %v2092, %v2088
    %v2257 = vpack.c.b16 %v2093, %v2089
    %v2258 = vpack.c.b16 %v2094, %v2090
    %v2259 = vpack.c.b16 %v2095, %v2091
    %v2260 = vpack.c.b16 %v2100, %v2096
    %v2261 = vpack.c.b16 %v2101, %v2097
    %v2262 = vpack.c.b16 %v2102, %v2098
    %v2263 = vpack.c.b16 %v2103, %v2099
    %v2264 = vpack.c.b16 %v2108, %v2104
    %v2265 = vpack.c.b16 %v2109, %v2105
    %v2266 = vpack.c.b16 %v2110, %v2106
    %v2267 = vpack.c.b16 %v2111, %v2107
    %v2268 = vpack.c.b16 %v2116, %v2112
    %v2269 = vpack.c.b16 %v2117, %v2113
    %v2270 = vpack.c.b16 %v2118, %v2114
    %v2271 = vpack.c.b16 %v2119, %v2115
    %v2272 = vpack.c.b16 %v2124, %v2120
    %v2273 = vpack.c.b16 %v2125, %v2121
    %v2274 = vpack.c.b16 %v2126, %v2122
    %v2275 = vpack.c.b16 %v2127, %v2123
    %v2276 = vpack.c.b16 %v2132, %v2128
    %v2277 = vpack.c.b16 %v2133, %v2129
    %v2278 = vpack.c.b16 %v2134, %v2130
    %v2279 = vpack.c.b16 %v2135, %v2131
    %v2280 = vpack.c.b16 %v2140, %v2136
    %v2281 = vpack.c.b16 %v2141, %v2137
    %v2282 = vpack.c.b16 %v2142, %v2138
    %v2283 = vpack.c.b16 %v2143, %v2139
    %v2284 = vpack.c.b16 %v2148, %v2144
    %v2285 = vpack.c.b16 %v2149, %v2145
    %v2286 = vpack.c.b16 %v2150, %v2146
    %v2287 = vpack.c.b16 %v2151, %v2147
    %v2288 = vpack.c.b16 %v2156, %v2152
    %v2289 = vpack.c.b16 %v2157, %v2153
    %v2290 = vpack.c.b16 %v2158, %v2154
    %v2291 = vpack.c.b16 %v2159, %v2155
    %v2292 = vpack.c.b16 %v2164, %v2160
    %v2293 = vpack.c.b16 %v2165, %v2161
    %v2294 = vpack.c.b16 %v2166, %v2162
    %v2295 = vpack.c.b16 %v2167, %v2163
    %2424 = vmatprep.subr.bf16.mxu0 %v2169
    %2425 = vmatpush1.bf16.msra.mxu0 %v2168
    %2426 = vmatprep.subr.bf16.mxu0 %v2173
    %2427 = vmatpush1.bf16.msra.mxu0 %v2172
    %2428 = vmatprep.subr.bf16.mxu0 %v2177
    %2429 = vmatpush1.bf16.msra.mxu0 %v2176
    %2430 = vmatprep.subr.bf16.mxu0 %v2181
    %2431 = vmatpush1.bf16.msra.mxu0 %v2180
    %2432 = vmatprep.subr.bf16.mxu0 %v2185
    %2433 = vmatpush1.bf16.msra.mxu0 %v2184
    %2434 = vmatprep.subr.bf16.mxu0 %v2189
    %2435 = vmatpush1.bf16.msra.mxu0 %v2188
    %2436 = vmatprep.subr.bf16.mxu0 %v2193
    %2437 = vmatpush1.bf16.msra.mxu0 %v2192
    %2438 = vmatprep.subr.bf16.mxu0 %v2197
    %2439 = vmatpush1.bf16.msra.mxu0 %v2196
    %2440 = vmatprep.subr.bf16.mxu0 %v2201
    %2441 = vmatpush1.bf16.msra.mxu0 %v2200
    %2442 = vmatprep.subr.bf16.mxu0 %v2205
    %2443 = vmatpush1.bf16.msra.mxu0 %v2204
    %2444 = vmatprep.subr.bf16.mxu0 %v2209
    %2445 = vmatpush1.bf16.msra.mxu0 %v2208
    %2446 = vmatprep.subr.bf16.mxu0 %v2213
    %2447 = vmatpush1.bf16.msra.mxu0 %v2212
    %2448 = vmatprep.subr.bf16.mxu0 %v2217
    %2449 = vmatpush1.bf16.msra.mxu0 %v2216
    %2450 = vmatprep.subr.bf16.mxu0 %v2221
    %2451 = vmatpush1.bf16.msra.mxu0 %v2220
    %2452 = vmatprep.subr.bf16.mxu0 %v2225
    %2453 = vmatpush1.bf16.msra.mxu0 %v2224
    %2454 = vmatprep.subr.bf16.mxu0 %v2229
    %2455 = vmatpush1.bf16.msra.mxu0 %v2228
    %2456 = vmatprep.mubr.bf16.mxu0 %v1631
    %2457 = vmatmul.mubr.bf16.gmra.mrb[0].mxu0 %v1630
    %v2458 = vpop.f32.mrb[0].mxu0
    %v2459 = vadd.f32 %v1767, %v2458
    %v2460 = vpop.f32.mrb[0].mxu0
    %v2461 = vadd.f32 %v1771, %v2460
    %v2462 = vpop.f32.mrb[0].mxu0
    %v2463 = vadd.f32 %v1767, %v2462
    %v2464 = vpop.f32.mrb[0].mxu0
    %v2465 = vadd.f32 %v1771, %v2464
    %2466 = vdwg.mxu0
    %2467 = vmatprep.subr.bf16.mxu0 %v2233
    %2468 = vmatpush1.bf16.msra.mxu0 %v2232
    %2469 = vmatprep.subr.bf16.mxu0 %v2237
    %2470 = vmatpush1.bf16.msra.mxu0 %v2236
    %2471 = vmatprep.subr.bf16.mxu0 %v2241
    %2472 = vmatpush1.bf16.msra.mxu0 %v2240
    %2473 = vmatprep.subr.bf16.mxu0 %v2245
    %2474 = vmatpush1.bf16.msra.mxu0 %v2244
    %2475 = vmatprep.subr.bf16.mxu0 %v2249
    %2476 = vmatpush1.bf16.msra.mxu0 %v2248
    %2477 = vmatprep.subr.bf16.mxu0 %v2253
    %2478 = vmatpush1.bf16.msra.mxu0 %v2252
    %2479 = vmatprep.subr.bf16.mxu0 %v2257
    %2480 = vmatpush1.bf16.msra.mxu0 %v2256
    %2481 = vmatprep.subr.bf16.mxu0 %v2261
    %2482 = vmatpush1.bf16.msra.mxu0 %v2260
    %2483 = vmatprep.subr.bf16.mxu0 %v2265
    %2484 = vmatpush1.bf16.msra.mxu0 %v2264
    %2485 = vmatprep.subr.bf16.mxu0 %v2269
    %2486 = vmatpush1.bf16.msra.mxu0 %v2268
    %2487 = vmatprep.subr.bf16.mxu0 %v2273
    %2488 = vmatpush1.bf16.msra.mxu0 %v2272
    %2489 = vmatprep.subr.bf16.mxu0 %v2277
    %2490 = vmatpush1.bf16.msra.mxu0 %v2276
    %2491 = vmatprep.subr.bf16.mxu0 %v2281
    %2492 = vmatpush1.bf16.msra.mxu0 %v2280
    %2493 = vmatprep.subr.bf16.mxu0 %v2285
    %2494 = vmatpush1.bf16.msra.mxu0 %v2284
    %2495 = vmatprep.subr.bf16.mxu0 %v2289
    %2496 = vmatpush1.bf16.msra.mxu0 %v2288
    %2497 = vmatprep.subr.bf16.mxu0 %v2293
    %2498 = vmatpush1.bf16.msra.mxu0 %v2292
    %2499 = vmatprep.mubr.bf16.mxu0 %v1633
    %2500 = vmatmul.mubr.bf16.gmra.mrb[0].mxu0 %v1632
    %v2501 = vpop.f32.mrb[0].mxu0
    %v2502 = vadd.f32 %v2459, %v2501
    %v2503 = vpop.f32.mrb[0].mxu0
    %v2504 = vadd.f32 %v2461, %v2503
    %v2505 = vpop.f32.mrb[0].mxu0
    %v2506 = vadd.f32 %v2463, %v2505
    %v2507 = vpop.f32.mrb[0].mxu0
    %v2508 = vadd.f32 %v2465, %v2507
    %2509 = vdwg.mxu0
    %2510 = vmatprep.subr.bf16.mxu0 %v2171
    %2511 = vmatpush1.bf16.msra.mxu0 %v2170
    %2512 = vmatprep.subr.bf16.mxu0 %v2175
    %2513 = vmatpush1.bf16.msra.mxu0 %v2174
    %2514 = vmatprep.subr.bf16.mxu0 %v2179
    %2515 = vmatpush1.bf16.msra.mxu0 %v2178
    %2516 = vmatprep.subr.bf16.mxu0 %v2183
    %2517 = vmatpush1.bf16.msra.mxu0 %v2182
    %2518 = vmatprep.subr.bf16.mxu0 %v2187
    %2519 = vmatpush1.bf16.msra.mxu0 %v2186
    %2520 = vmatprep.subr.bf16.mxu0 %v2191
    %2521 = vmatpush1.bf16.msra.mxu0 %v2190
    %2522 = vmatprep.subr.bf16.mxu0 %v2195
    %2523 = vmatpush1.bf16.msra.mxu0 %v2194
    %2524 = vmatprep.subr.bf16.mxu0 %v2199
    %2525 = vmatpush1.bf16.msra.mxu0 %v2198
    %2526 = vmatprep.subr.bf16.mxu0 %v2203
    %2527 = vmatpush1.bf16.msra.mxu0 %v2202
    %2528 = vmatprep.subr.bf16.mxu0 %v2207
    %2529 = vmatpush1.bf16.msra.mxu0 %v2206
    %2530 = vmatprep.subr.bf16.mxu0 %v2211
    %2531 = vmatpush1.bf16.msra.mxu0 %v2210
    %2532 = vmatprep.subr.bf16.mxu0 %v2215
    %2533 = vmatpush1.bf16.msra.mxu0 %v2214
    %2534 = vmatprep.subr.bf16.mxu0 %v2219
    %2535 = vmatpush1.bf16.msra.mxu0 %v2218
    %2536 = vmatprep.subr.bf16.mxu0 %v2223
    %2537 = vmatpush1.bf16.msra.mxu0 %v2222
    %2538 = vmatprep.subr.bf16.mxu0 %v2227
    %2539 = vmatpush1.bf16.msra.mxu0 %v2226
    %2540 = vmatprep.subr.bf16.mxu0 %v2231
    %2541 = vmatpush1.bf16.msra.mxu0 %v2230
    %2542 = vmatprep.mubr.bf16.mxu0 %v1631
    %2543 = vmatmul.mubr.bf16.gmra.mrb[0].mxu0 %v1630
    %v2544 = vpop.f32.mrb[0].mxu0
    %v2545 = vadd.f32 %v1775, %v2544
    %v2546 = vpop.f32.mrb[0].mxu0
    %v2547 = vadd.f32 %v1779, %v2546
    %v2548 = vpop.f32.mrb[0].mxu0
    %v2549 = vadd.f32 %v1775, %v2548
    %v2550 = vpop.f32.mrb[0].mxu0
    %v2551 = vadd.f32 %v1779, %v2550
    %2552 = vdwg.mxu0
    %2553 = vmatprep.subr.bf16.mxu0 %v2235
    %2554 = vmatpush1.bf16.msra.mxu0 %v2234
    %2555 = vmatprep.subr.bf16.mxu0 %v2239
    %2556 = vmatpush1.bf16.msra.mxu0 %v2238
    %2557 = vmatprep.subr.bf16.mxu0 %v2243
    %2558 = vmatpush1.bf16.msra.mxu0 %v2242
    %2559 = vmatprep.subr.bf16.mxu0 %v2247
    %2560 = vmatpush1.bf16.msra.mxu0 %v2246
    %2561 = vmatprep.subr.bf16.mxu0 %v2251
    %2562 = vmatpush1.bf16.msra.mxu0 %v2250
    %2563 = vmatprep.subr.bf16.mxu0 %v2255
    %2564 = vmatpush1.bf16.msra.mxu0 %v2254
    %2565 = vmatprep.subr.bf16.mxu0 %v2259
    %2566 = vmatpush1.bf16.msra.mxu0 %v2258
    %2567 = vmatprep.subr.bf16.mxu0 %v2263
    %2568 = vmatpush1.bf16.msra.mxu0 %v2262
    %2569 = vmatprep.subr.bf16.mxu0 %v2267
    %2570 = vmatpush1.bf16.msra.mxu0 %v2266
    %2571 = vmatprep.subr.bf16.mxu0 %v2271
    %2572 = vmatpush1.bf16.msra.mxu0 %v2270
    %2573 = vmatprep.subr.bf16.mxu0 %v2275
    %2574 = vmatpush1.bf16.msra.mxu0 %v2274
    %2575 = vmatprep.subr.bf16.mxu0 %v2279
    %2576 = vmatpush1.bf16.msra.mxu0 %v2278
    %2577 = vmatprep.subr.bf16.mxu0 %v2283
    %2578 = vmatpush1.bf16.msra.mxu0 %v2282
    %2579 = vmatprep.subr.bf16.mxu0 %v2287
    %2580 = vmatpush1.bf16.msra.mxu0 %v2286
    %2581 = vmatprep.subr.bf16.mxu0 %v2291
    %2582 = vmatpush1.bf16.msra.mxu0 %v2290
    %2583 = vmatprep.subr.bf16.mxu0 %v2295
    %2584 = vmatpush1.bf16.msra.mxu0 %v2294
    %2585 = vmatprep.mubr.bf16.mxu0 %v1633
    %2586 = vmatmul.mubr.bf16.gmra.mrb[0].mxu0 %v1632
    %v2587 = vpop.f32.mrb[0].mxu0
    %v2588 = vadd.f32 %v2545, %v2587
    %v2589 = vpop.f32.mrb[0].mxu0
    %v2590 = vadd.f32 %v2547, %v2589
    %v2591 = vpop.f32.mrb[0].mxu0
    %v2592 = vadd.f32 %v2549, %v2591
    %v2593 = vpop.f32.mrb[0].mxu0
    %v2594 = vadd.f32 %v2551, %v2593
    %2595 = vdwg.mxu0
    %v2596 = vmax.f32 %v2502, 0.0
    %v2597 = vmax.f32 %v2504, 0.0
    %v2598 = vmax.f32 %v2588, 0.0
    %v2599 = vmax.f32 %v2590, 0.0
    %v2600 = vmax.f32 %v2506, 0.0
    %v2601 = vmax.f32 %v2508, 0.0
    %v2602 = vmax.f32 %v2592, 0.0
    %v2603 = vmax.f32 %v2594, 0.0
    %v2604 = vpack.c.bf16 %v2600, %v2596
    %v2605 = vpack.c.bf16 %v2601, %v2597
    %v2606 = vpack.c.bf16 %v2602, %v2598
    %v2607 = vpack.c.bf16 %v2603, %v2599
    %v2608 = vld [vmem:[%s5] sm:$0xf]
    %v2609 = vld [vmem:[%s5 + $0x4] sm:$0xf]
    %v2610 = vld [vmem:[%s5 + $0x8] sm:$0xf]
    %v2611 = vld [vmem:[%s5 + $0xc] sm:$0xf]
    %v2612 = vld [vmem:[%s5 + $0x10] sm:$0xf]
    %v2613 = vld [vmem:[%s5 + $0x14] sm:$0xf]
    %v2614 = vld [vmem:[%s5 + $0x18] sm:$0xf]
    %v2615 = vld [vmem:[%s5 + $0x1c] sm:$0xf]
    %v2616 = vld [vmem:[%s5 + $0x20] sm:$0xf]
    %v2617 = vld [vmem:[%s5 + $0x24] sm:$0xf]
    %v2618 = vld [vmem:[%s5 + $0x28] sm:$0xf]
    %v2619 = vld [vmem:[%s5 + $0x2c] sm:$0xf]
    %v2620 = vld [vmem:[%s5 + $0x30] sm:$0xf]
    %v2621 = vld [vmem:[%s5 + $0x34] sm:$0xf]
    %v2622 = vld [vmem:[%s5 + $0x38] sm:$0xf]
    %v2623 = vld [vmem:[%s5 + $0x3c] sm:$0xf]
    %v2624 = vld [vmem:[%s5 + $0x40] sm:$0xf]
    %v2625 = vld [vmem:[%s5 + $0x44] sm:$0xf]
    %v2626 = vld [vmem:[%s5 + $0x48] sm:$0xf]
    %v2627 = vld [vmem:[%s5 + $0x4c] sm:$0xf]
    %v2628 = vld [vmem:[%s5 + $0x50] sm:$0xf]
    %v2629 = vld [vmem:[%s5 + $0x54] sm:$0xf]
    %v2630 = vld [vmem:[%s5 + $0x58] sm:$0xf]
    %v2631 = vld [vmem:[%s5 + $0x5c] sm:$0xf]
    %v2632 = vld [vmem:[%s5 + $0x60] sm:$0xf]
    %v2633 = vld [vmem:[%s5 + $0x64] sm:$0xf]
    %v2634 = vld [vmem:[%s5 + $0x68] sm:$0xf]
    %v2635 = vld [vmem:[%s5 + $0x6c] sm:$0xf]
    %v2636 = vld [vmem:[%s5 + $0x70] sm:$0xf]
    %v2637 = vld [vmem:[%s5 + $0x74] sm:$0xf]
    %v2638 = vld [vmem:[%s5 + $0x78] sm:$0xf]
    %v2639 = vld [vmem:[%s5 + $0x7c] sm:$0xf]
    %v2640 = vld [vmem:[%s5 + $0x80] sm:$0xf]
    %v2641 = vld [vmem:[%s5 + $0x84] sm:$0xf]
    %v2642 = vld [vmem:[%s5 + $0x88] sm:$0xf]
    %v2643 = vld [vmem:[%s5 + $0x8c] sm:$0xf]
    %v2644 = vld [vmem:[%s5 + $0x90] sm:$0xf]
    %v2645 = vld [vmem:[%s5 + $0x94] sm:$0xf]
    %v2646 = vld [vmem:[%s5 + $0x98] sm:$0xf]
    %v2647 = vld [vmem:[%s5 + $0x9c] sm:$0xf]
    %v2648 = vld [vmem:[%s5 + $0xa0] sm:$0xf]
    %v2649 = vld [vmem:[%s5 + $0xa4] sm:$0xf]
    %v2650 = vld [vmem:[%s5 + $0xa8] sm:$0xf]
    %v2651 = vld [vmem:[%s5 + $0xac] sm:$0xf]
    %v2652 = vld [vmem:[%s5 + $0xb0] sm:$0xf]
    %v2653 = vld [vmem:[%s5 + $0xb4] sm:$0xf]
    %v2654 = vld [vmem:[%s5 + $0xb8] sm:$0xf]
    %v2655 = vld [vmem:[%s5 + $0xbc] sm:$0xf]
    %v2656 = vld [vmem:[%s5 + $0xc0] sm:$0xf]
    %v2657 = vld [vmem:[%s5 + $0xc4] sm:$0xf]
    %v2658 = vld [vmem:[%s5 + $0xc8] sm:$0xf]
    %v2659 = vld [vmem:[%s5 + $0xcc] sm:$0xf]
    %v2660 = vld [vmem:[%s5 + $0xd0] sm:$0xf]
    %v2661 = vld [vmem:[%s5 + $0xd4] sm:$0xf]
    %v2662 = vld [vmem:[%s5 + $0xd8] sm:$0xf]
    %v2663 = vld [vmem:[%s5 + $0xdc] sm:$0xf]
    %v2664 = vld [vmem:[%s5 + $0xe0] sm:$0xf]
    %v2665 = vld [vmem:[%s5 + $0xe4] sm:$0xf]
    %v2666 = vld [vmem:[%s5 + $0xe8] sm:$0xf]
    %v2667 = vld [vmem:[%s5 + $0xec] sm:$0xf]
    %v2668 = vld [vmem:[%s5 + $0xf0] sm:$0xf]
    %v2669 = vld [vmem:[%s5 + $0xf4] sm:$0xf]
    %v2670 = vld [vmem:[%s5 + $0xf8] sm:$0xf]
    %v2671 = vld [vmem:[%s5 + $0xfc] sm:$0xf]
    %v2672 = vld [vmem:[%s6] sm:$0x1]
    %v2674 = vlaneseq
    %v2675 = vshrl.u32 %v2674, 7
    %v2676 = vsub.s32 0, %v2675
    %v2677 = vrot.slane %v2672, %v2676
    %v2743 = vunpack.c.l.b16 %v2608
    %v2744 = vunpack.c.l.b16 %v2609
    %v2745 = vunpack.c.l.b16 %v2610
    %v2746 = vunpack.c.l.b16 %v2611
    %v2747 = vunpack.c.l.b16 %v2612
    %v2748 = vunpack.c.l.b16 %v2613
    %v2749 = vunpack.c.l.b16 %v2614
    %v2750 = vunpack.c.l.b16 %v2615
    %v2751 = vunpack.c.l.b16 %v2616
    %v2752 = vunpack.c.l.b16 %v2617
    %v2753 = vunpack.c.l.b16 %v2618
    %v2754 = vunpack.c.l.b16 %v2619
    %v2755 = vunpack.c.l.b16 %v2620
    %v2756 = vunpack.c.l.b16 %v2621
    %v2757 = vunpack.c.l.b16 %v2622
    %v2758 = vunpack.c.l.b16 %v2623
    %v2759 = vunpack.c.l.b16 %v2624
    %v2760 = vunpack.c.l.b16 %v2625
    %v2761 = vunpack.c.l.b16 %v2626
    %v2762 = vunpack.c.l.b16 %v2627
    %v2763 = vunpack.c.l.b16 %v2628
    %v2764 = vunpack.c.l.b16 %v2629
    %v2765 = vunpack.c.l.b16 %v2630
    %v2766 = vunpack.c.l.b16 %v2631
    %v2767 = vunpack.c.l.b16 %v2632
    %v2768 = vunpack.c.l.b16 %v2633
    %v2769 = vunpack.c.l.b16 %v2634
    %v2770 = vunpack.c.l.b16 %v2635
    %v2771 = vunpack.c.l.b16 %v2636
    %v2772 = vunpack.c.l.b16 %v2637
    %v2773 = vunpack.c.l.b16 %v2638
    %v2774 = vunpack.c.l.b16 %v2639
    %v2775 = vunpack.c.l.b16 %v2640
    %v2776 = vunpack.c.l.b16 %v2641
    %v2777 = vunpack.c.l.b16 %v2642
    %v2778 = vunpack.c.l.b16 %v2643
    %v2779 = vunpack.c.l.b16 %v2644
    %v2780 = vunpack.c.l.b16 %v2645
    %v2781 = vunpack.c.l.b16 %v2646
    %v2782 = vunpack.c.l.b16 %v2647
    %v2783 = vunpack.c.l.b16 %v2648
    %v2784 = vunpack.c.l.b16 %v2649
    %v2785 = vunpack.c.l.b16 %v2650
    %v2786 = vunpack.c.l.b16 %v2651
    %v2787 = vunpack.c.l.b16 %v2652
    %v2788 = vunpack.c.l.b16 %v2653
    %v2789 = vunpack.c.l.b16 %v2654
    %v2790 = vunpack.c.l.b16 %v2655
    %v2791 = vunpack.c.l.b16 %v2656
    %v2792 = vunpack.c.l.b16 %v2657
    %v2793 = vunpack.c.l.b16 %v2658
    %v2794 = vunpack.c.l.b16 %v2659
    %v2795 = vunpack.c.l.b16 %v2660
    %v2796 = vunpack.c.l.b16 %v2661
    %v2797 = vunpack.c.l.b16 %v2662
    %v2798 = vunpack.c.l.b16 %v2663
    %v2799 = vunpack.c.l.b16 %v2664
    %v2800 = vunpack.c.l.b16 %v2665
    %v2801 = vunpack.c.l.b16 %v2666
    %v2802 = vunpack.c.l.b16 %v2667
    %v2803 = vunpack.c.l.b16 %v2668
    %v2804 = vunpack.c.l.b16 %v2669
    %v2805 = vunpack.c.l.b16 %v2670
    %v2806 = vunpack.c.l.b16 %v2671
    %v2807 = vpack.c.b16 %v2744, %v2743
    %v2808 = vpack.c.b16 %v2746, %v2745
    %v2809 = vpack.c.b16 %v2748, %v2747
    %v2810 = vpack.c.b16 %v2750, %v2749
    %v2811 = vpack.c.b16 %v2752, %v2751
    %v2812 = vpack.c.b16 %v2754, %v2753
    %v2813 = vpack.c.b16 %v2756, %v2755
    %v2814 = vpack.c.b16 %v2758, %v2757
    %v2815 = vpack.c.b16 %v2760, %v2759
    %v2816 = vpack.c.b16 %v2762, %v2761
    %v2817 = vpack.c.b16 %v2764, %v2763
    %v2818 = vpack.c.b16 %v2766, %v2765
    %v2819 = vpack.c.b16 %v2768, %v2767
    %v2820 = vpack.c.b16 %v2770, %v2769
    %v2821 = vpack.c.b16 %v2772, %v2771
    %v2822 = vpack.c.b16 %v2774, %v2773
    %v2823 = vpack.c.b16 %v2776, %v2775
    %v2824 = vpack.c.b16 %v2778, %v2777
    %v2825 = vpack.c.b16 %v2780, %v2779
    %v2826 = vpack.c.b16 %v2782, %v2781
    %v2827 = vpack.c.b16 %v2784, %v2783
    %v2828 = vpack.c.b16 %v2786, %v2785
    %v2829 = vpack.c.b16 %v2788, %v2787
    %v2830 = vpack.c.b16 %v2790, %v2789
    %v2831 = vpack.c.b16 %v2792, %v2791
    %v2832 = vpack.c.b16 %v2794, %v2793
    %v2833 = vpack.c.b16 %v2796, %v2795
    %v2834 = vpack.c.b16 %v2798, %v2797
    %v2835 = vpack.c.b16 %v2800, %v2799
    %v2836 = vpack.c.b16 %v2802, %v2801
    %v2837 = vpack.c.b16 %v2804, %v2803
    %v2838 = vpack.c.b16 %v2806, %v2805
    %2871 = vmatprep.subr.bf16.mxu0 0
    %2872 = vmatpush1.bf16.msra.mxu0 %v2807
    %2873 = vmatprep.subr.bf16.mxu0 0
    %2874 = vmatpush1.bf16.msra.mxu0 %v2808
    %2875 = vmatprep.subr.bf16.mxu0 0
    %2876 = vmatpush1.bf16.msra.mxu0 %v2809
    %2877 = vmatprep.subr.bf16.mxu0 0
    %2878 = vmatpush1.bf16.msra.mxu0 %v2810
    %2879 = vmatprep.subr.bf16.mxu0 0
    %2880 = vmatpush1.bf16.msra.mxu0 %v2811
    %2881 = vmatprep.subr.bf16.mxu0 0
    %2882 = vmatpush1.bf16.msra.mxu0 %v2812
    %2883 = vmatprep.subr.bf16.mxu0 0
    %2884 = vmatpush1.bf16.msra.mxu0 %v2813
    %2885 = vmatprep.subr.bf16.mxu0 0
    %2886 = vmatpush1.bf16.msra.mxu0 %v2814
    %2887 = vmatprep.subr.bf16.mxu0 0
    %2888 = vmatpush1.bf16.msra.mxu0 %v2815
    %2889 = vmatprep.subr.bf16.mxu0 0
    %2890 = vmatpush1.bf16.msra.mxu0 %v2816
    %2891 = vmatprep.subr.bf16.mxu0 0
    %2892 = vmatpush1.bf16.msra.mxu0 %v2817
    %2893 = vmatprep.subr.bf16.mxu0 0
    %2894 = vmatpush1.bf16.msra.mxu0 %v2818
    %2895 = vmatprep.subr.bf16.mxu0 0
    %2896 = vmatpush1.bf16.msra.mxu0 %v2819
    %2897 = vmatprep.subr.bf16.mxu0 0
    %2898 = vmatpush1.bf16.msra.mxu0 %v2820
    %2899 = vmatprep.subr.bf16.mxu0 0
    %2900 = vmatpush1.bf16.msra.mxu0 %v2821
    %2901 = vmatprep.subr.bf16.mxu0 0
    %2902 = vmatpush1.bf16.msra.mxu0 %v2822
    %2903 = vmatprep.mubr.bf16.mxu0 %v2605
    %2904 = vmatmul.mubr.bf16.gmra.mrb[0].mxu0 %v2604
    %v2905 = vpop.f32.mrb[0].mxu0
    %v2906 = vadd.f32 %v2677, %v2905
    %v2907 = vpop.f32.mrb[0].mxu0
    %v2908 = vpop.f32.mrb[0].mxu0
    %v2909 = vadd.f32 %v2677, %v2908
    %v2910 = vpop.f32.mrb[0].mxu0
    %2911 = vdwg.mxu0
    %2912 = vmatprep.subr.bf16.mxu0 0
    %2913 = vmatpush1.bf16.msra.mxu0 %v2823
    %2914 = vmatprep.subr.bf16.mxu0 0
    %2915 = vmatpush1.bf16.msra.mxu0 %v2824
    %2916 = vmatprep.subr.bf16.mxu0 0
    %2917 = vmatpush1.bf16.msra.mxu0 %v2825
    %2918 = vmatprep.subr.bf16.mxu0 0
    %2919 = vmatpush1.bf16.msra.mxu0 %v2826
    %2920 = vmatprep.subr.bf16.mxu0 0
    %2921 = vmatpush1.bf16.msra.mxu0 %v2827
    %2922 = vmatprep.subr.bf16.mxu0 0
    %2923 = vmatpush1.bf16.msra.mxu0 %v2828
    %2924 = vmatprep.subr.bf16.mxu0 0
    %2925 = vmatpush1.bf16.msra.mxu0 %v2829
    %2926 = vmatprep.subr.bf16.mxu0 0
    %2927 = vmatpush1.bf16.msra.mxu0 %v2830
    %2928 = vmatprep.subr.bf16.mxu0 0
    %2929 = vmatpush1.bf16.msra.mxu0 %v2831
    %2930 = vmatprep.subr.bf16.mxu0 0
    %2931 = vmatpush1.bf16.msra.mxu0 %v2832
    %2932 = vmatprep.subr.bf16.mxu0 0
    %2933 = vmatpush1.bf16.msra.mxu0 %v2833
    %2934 = vmatprep.subr.bf16.mxu0 0
    %2935 = vmatpush1.bf16.msra.mxu0 %v2834
    %2936 = vmatprep.subr.bf16.mxu0 0
    %2937 = vmatpush1.bf16.msra.mxu0 %v2835
    %2938 = vmatprep.subr.bf16.mxu0 0
    %2939 = vmatpush1.bf16.msra.mxu0 %v2836
    %2940 = vmatprep.subr.bf16.mxu0 0
    %2941 = vmatpush1.bf16.msra.mxu0 %v2837
    %2942 = vmatprep.subr.bf16.mxu0 0
    %2943 = vmatpush1.bf16.msra.mxu0 %v2838
    %2944 = vmatprep.mubr.bf16.mxu0 %v2607
    %2945 = vmatmul.mubr.bf16.gmra.mrb[0].mxu0 %v2606
    %v2946 = vpop.f32.mrb[0].mxu0
    %v2947 = vadd.f32 %v2906, %v2946
    %v2948 = vpop.f32.mrb[0].mxu0
    %v2949 = vpop.f32.mrb[0].mxu0
    %v2950 = vadd.f32 %v2909, %v2949
    %v2951 = vpop.f32.mrb[0].mxu0
    %2952 = vdwg.mxu0
    %2953 = vst [vmem:[%s7] sm:$0xff] %v2947
    %2954 = vst [vmem:[%s7 + $0x8] sm:$0xff] %v2950
    // Predicated region
    $region38: #{neural_network_forward.1} parent=1 // pred_check
      _
    $region39: #{neural_network_forward.1} parent=1 // pred_check_branch
      %2956 = sbr.rel (0) target = $region41
    $region40: #{neural_network_forward.1} parent=1 // pred_region
      _
    $region41: #{neural_network_forward.1} parent=1 // pred_fallthru
      _
    // Predicated region
    $region42: #{neural_network_forward.1} parent=1 // pred_check
      _
    $region43: #{neural_network_forward.1} parent=1 // pred_check_branch
      %2958 = sbr.rel (0) target = $region45
    $region44: #{neural_network_forward.1} parent=1 // pred_region
      _
    $region45: #{neural_network_forward.1} parent=1 // pred_fallthru
      _
    %2959 = vsyncpa [#allocation3], 1
    %2960 = vsyncpa [#allocation5], 1

</llo_original>
